<compile_context>
chip_gen: v6e
topology: v6e:2x2x1
jax: 0.10.0
libtpu: 0.0.40
codegen_flags: <defaults>
</compile_context>

<pallas_src>
import functools

import jax
import jax.numpy as jnp
from jax.experimental import pallas as pl
from jax.experimental.pallas import tpu as pltpu

_BIG = 1e30
# TODO(synk): re-sweep per generation (v6e can afford 64-96 MiB, v7x physical VMEM is 64 MiB).
_VMEM_LIMIT = 32 * 1024 * 1024


# ----------------------------------------------------------------------------- helpers

def _pick_row_tile(n, max_tile):
    """Largest sublane-aligned tile <= max_tile that divides n (full n for small inputs)."""
    if n <= max_tile:
        return n
    for t in range(max_tile, 7, -1):
        if n % t == 0 and t % 8 == 0:
            return t
    # TODO(synk): cdiv + padding fallback for awkward P (currently falls back to one block).
    return n


def _compiler_params(semantics):
    return pltpu.CompilerParams(
        dimension_semantics=semantics,
        vmem_limit_bytes=_VMEM_LIMIT,
    )


# ----------------------------------------------------------------------------- kernels

def _dgcnn_knn_kernel(*refs, n_layers, relus, k):
    """Fully fused DGCNN edge-conv for one (batch, query-row-tile) grid cell:

    Gram-form pairwise sq-distances (MXU, self masked) -> iterative k-NN argmin selection
    -> neighbor gather fused with MLP layer 1 via weight splitting -> remaining shared-MLP
    layers -> running max over the k neighbors.  Only the (TQ, C_out) result leaves VMEM
    (no [P,P] distances, no [P,k] indices, no [P,k,2C] edge tensor ever reach HBM)."""
    post_ref, posq_ref, xf_ref, xq_ref, wa_ref, wd_ref = refs[:6]
    w_refs = refs[6:6 + n_layers - 1]
    b_refs = refs[6 + n_layers - 1:6 + 2 * n_layers - 1]
    o_ref = refs[-1]

    pk_t = post_ref[0]                                         # (3, P)  keys, lane-dense
    pq = posq_ref[0]                                           # (TQ, 3) query rows
    xf = xf_ref[0]                                             # (P, C)  full cloud feats
    xq = xq_ref[0]                                             # (TQ, C) center feats
    tq = pq.shape[0]
    p = pk_t.shape[1]

    # ---- pairwise squared distances d = |q|^2 + |k|^2 - 2 q.k  (diag = self masked out)
    nq = jnp.sum(pq * pq, axis=-1, keepdims=True)              # (TQ, 1)
    nk = jnp.sum(pk_t * pk_t, axis=0, keepdims=True)           # (1, P)
    cross = jnp.dot(pq, pk_t, preferred_element_type=jnp.float32)   # (TQ, P) on the MXU
    d = nq + nk - 2.0 * cross
    rowi = jax.lax.broadcasted_iota(jnp.int32, (tq, p), 0) + pl.program_id(1) * tq
    coli = jax.lax.broadcasted_iota(jnp.int32, (tq, p), 1)
    d = jnp.where(rowi == coli, jnp.float32(_BIG), d)
    colf = coli.astype(jnp.float32)                            # f32 column ids (exact, P < 2^24)

    # ---- gather fused with MLP layer 1 (weight split); hoisted out of the k loop.
    g = jnp.dot(xf.astype(jnp.bfloat16), wa_ref[...],
                preferred_element_type=jnp.float32)            # (P, C1)  = x @ W_a
    g_b = g.astype(jnp.bfloat16)
    cpre = (jnp.dot(xq.astype(jnp.bfloat16), wd_ref[...],
                    preferred_element_type=jnp.float32)
            + b_refs[0][...])                                  # (TQ, C1) = x_i @ (W_b - W_a) + b1
    w_rest = [w[...] for w in w_refs]                          # hoisted weight loads
    b_rest = [jnp.broadcast_to(b_refs[l][...], (tq, b_refs[l].shape[-1]))
              for l in range(1, n_layers)]                     # hoisted bias broadcasts

    acc = None
    for _ in range(k):                                         # static unroll over k neighbors
        m = jnp.min(d, axis=-1, keepdims=True)                 # (TQ, 1) nearest remaining dist
        idx = jnp.min(jnp.where(d <= m, colf, jnp.float32(p)),
                      axis=-1, keepdims=True)                  # first-index argmin
        sel = colf == idx                                      # (TQ, P) exact one-hot
        d = jnp.where(sel, jnp.float32(_BIG), d)               # exclude from later passes
        h = jnp.dot(sel.astype(jnp.bfloat16), g_b,
                    preferred_element_type=jnp.float32) + cpre # gather + layer 1
        if relus[0]:                                           # static Python bool
            h = jnp.maximum(h, 0.0)
        for l in range(1, n_layers):
            h = jnp.dot(h.astype(jnp.bfloat16), w_rest[l - 1],
                        preferred_element_type=jnp.float32) + b_rest[l - 1]
            if relus[l]:
                h = jnp.maximum(h, 0.0)
        acc = h if acc is None else jnp.maximum(acc, h)        # max over k, in VMEM
    o_ref[0] = acc


def _sa_head_kernel(*refs, n_sa, n_head, sa_relus, head_relus):
    """Fused GlobalSAModule + final head, tiled over the cloud.  Per row tile: SA MLP
    (first layer split into h @ W_h + pos @ W_pos, no concat) -> tile max -> running max
    in a VMEM scratch.  On the last tile of each cloud: final head MLP (plain_last,
    dropout is eval-mode identity) writes the (1, n_out) result."""
    h_ref, pos_ref, wh_ref, wp_ref = refs[:4]
    off = 4
    sa_w = refs[off:off + n_sa - 1]; off += n_sa - 1
    sa_b = refs[off:off + n_sa]; off += n_sa
    hd_w = refs[off:off + n_head]; off += n_head
    hd_b = refs[off:off + n_head]; off += n_head
    o_ref = refs[off]
    pool = refs[off + 1]                                       # VMEM running-max scratch

    ti = pl.program_id(1)

    g = (jnp.dot(h_ref[0].astype(jnp.bfloat16), wh_ref[...],
                 preferred_element_type=jnp.float32)
         + jnp.dot(pos_ref[0].astype(jnp.bfloat16), wp_ref[...],
                   preferred_element_type=jnp.float32)
         + sa_b[0][...])
    if sa_relus[0]:
        g = jnp.maximum(g, 0.0)
    for l in range(1, n_sa):
        g = jnp.dot(g.astype(jnp.bfloat16), sa_w[l - 1][...],
                    preferred_element_type=jnp.float32) + sa_b[l][...]
        if sa_relus[l]:
            g = jnp.maximum(g, 0.0)
    tile_max = jnp.max(g, axis=0, keepdims=True)               # (1, C_sa)

    @pl.when(ti == 0)
    def _():
        pool[...] = tile_max

    @pl.when(ti > 0)
    def _():
        pool[...] = jnp.maximum(pool[...], tile_max)

    @pl.when(ti == pl.num_programs(1) - 1)
    def _():
        z = pool[...]                                          # (1, C_sa) pooled descriptor
        for l in range(n_head):
            z = jnp.dot(z.astype(jnp.bfloat16), hd_w[l][...],
                        preferred_element_type=jnp.float32) + hd_b[l][...]
            if head_relus[l]:
                z = jnp.maximum(z, 0.0)
        o_ref[0] = z                                           # (1, n_out)


# ----------------------------------------------------------------------------- wrappers

def dgcnn_layer(x, pos, mlp, relus, k):
    """DGCNNLayer: kNN over pos (self excluded), edge feats [x_j - x_i, x_i], shared MLP
    (Linear + folded-BN bias + ReLU), max aggregation over the k neighbors."""
    b, p, c = x.shape
    ws, bs = mlp["w"], mlp["b"]
    n_layers = len(ws)
    cout = ws[-1].shape[1]
    tq = _pick_row_tile(p, 256)

    # Split layer-1 weight:  [x_j - x_i, x_i] @ W1  ==  x_j @ W_a + x_i @ (W_b - W_a).
    w1 = ws[0].astype(jnp.float32)
    w_a = w1[:c].astype(jnp.bfloat16)
    w_d = (w1[c:] - w1[:c]).astype(jnp.bfloat16)
    pos_t = jnp.swapaxes(pos, 1, 2)                            # (B, 3, P) lane-dense key block

    in_specs = [
        pl.BlockSpec((1, 3, p), lambda bi, ti: (bi, 0, 0)),    # pos^T  (full cloud, keys)
        pl.BlockSpec((1, tq, 3), lambda bi, ti: (bi, ti, 0)),  # pos    (query rows)
        pl.BlockSpec((1, p, c), lambda bi, ti: (bi, 0, 0)),    # x      (full cloud, gather src)
        pl.BlockSpec((1, tq, c), lambda bi, ti: (bi, ti, 0)),  # x      (center rows)
        pl.BlockSpec(w_a.shape, lambda bi, ti: (0, 0)),
        pl.BlockSpec(w_d.shape, lambda bi, ti: (0, 0)),
    ]
    for w in ws[1:]:
        in_specs.append(pl.BlockSpec(w.shape, lambda bi, ti: (0, 0)))
    for bb in bs:
        in_specs.append(pl.BlockSpec(bb.shape, lambda bi, ti: (0, 0)))

    return pl.pallas_call(
        functools.partial(_dgcnn_knn_kernel, n_layers=n_layers, relus=relus, k=k),
        out_shape=jax.ShapeDtypeStruct((b, p, cout), jnp.float32),
        grid=(b, p // tq),
        in_specs=in_specs,
        out_specs=pl.BlockSpec((1, tq, cout), lambda bi, ti: (bi, ti, 0)),
        compiler_params=_compiler_params(("parallel", "parallel")),
    )(pos_t, pos, x, x, w_a, w_d, *ws[1:], *bs)


def global_sa_and_head(h, pos, sa_mlp, sa_relus, head_mlp, head_relus):
    """GlobalSAModule (MLP([x, pos]) + per-cloud max pool) fused with the final MLP head,
    tiled over the cloud with a VMEM running-max scratch ('arbitrary' reduction axis)."""
    b, p, c1 = h.shape
    sa_w, sa_b = sa_mlp["w"], sa_mlp["b"]
    hd_w, hd_b = head_mlp["w"], head_mlp["b"]
    n_sa, n_head = len(sa_w), len(hd_w)
    n_out = hd_w[-1].shape[1]
    c_sa = sa_w[-1].shape[1]
    tp = _pick_row_tile(p, 512)

    # Split the first SA layer so [h, pos] is never concatenated: g = h @ W_h + pos @ W_pos.
    w1 = sa_w[0].astype(jnp.float32)
    w_h = w1[:c1].astype(jnp.bfloat16)                         # (C1, C2) feature half
    w_p = w1[c1:].astype(jnp.bfloat16)                         # (3,  C2) pos half

    in_specs = [
        pl.BlockSpec((1, tp, c1), lambda bi, ti: (bi, ti, 0)),
        pl.BlockSpec((1, tp, 3), lambda bi, ti: (bi, ti, 0)),
        pl.BlockSpec(w_h.shape, lambda bi, ti: (0, 0)),
        pl.BlockSpec(w_p.shape, lambda bi, ti: (0, 0)),
    ]
    for arr in (*sa_w[1:], *sa_b, *hd_w, *hd_b):
        in_specs.append(pl.BlockSpec(arr.shape, lambda bi, ti: (0, 0)))

    out = pl.pallas_call(
        functools.partial(_sa_head_kernel, n_sa=n_sa, n_head=n_head,
                          sa_relus=sa_relus, head_relus=head_relus),
        out_shape=jax.ShapeDtypeStruct((b, 1, n_out), jnp.float32),
        grid=(b, p // tp),
        in_specs=in_specs,
        out_specs=pl.BlockSpec((1, 1, n_out), lambda bi, ti: (bi, 0, 0)),
        scratch_shapes=[pltpu.VMEM((1, c_sa), jnp.float32)],
        compiler_params=_compiler_params(("parallel", "arbitrary")),
    )(h, pos, w_h, w_p, *sa_w[1:], *sa_b, *hd_w, *hd_b)
    return out.reshape(b, n_out)


# ----------------------------------------------------------------------------- model

def model_forward(params, x, pos, *, k, dgcnn_relus, sa_relus, head_relus):
    h = dgcnn_layer(x, pos, params["dgcnn"], dgcnn_relus, k)   # step 0: 'dgcnn'
    out = global_sa_and_head(h, pos, params["sa_global"], sa_relus,
                             params["final"], head_relus)      # step 1: 'sa-global' + head
    return out                                                 # [B, n_out]


# ----------------------------------------------------------------------------- params

def make_mlp_params(key, dims, plain_last=False):
    """MLP(dims): Linear(no bias) + BatchNorm(eval, folded into W/bias) + ReLU per layer;
    plain_last => last layer is a plain linear. Weights stored in bf16, BN scale folded."""
    ws, bs, relus = [], [], []
    n_layers = len(dims) - 1
    for i in range(n_layers):
        key, kw, ks, kb = jax.random.split(key, 4)
        fan_in = dims[i]
        w = jax.random.normal(kw, (dims[i], dims[i + 1]), jnp.float32) * (2.0 / fan_in) ** 0.5
        last = i == n_layers - 1
        if plain_last and last:
            scale = jnp.ones((1, dims[i + 1]), jnp.float32)
            bias = jnp.zeros((1, dims[i + 1]), jnp.float32)
            relu = False
        else:
            scale = 1.0 + 0.1 * jax.random.normal(ks, (1, dims[i + 1]), jnp.float32)
            bias = 0.1 * jax.random.normal(kb, (1, dims[i + 1]), jnp.float32)
            relu = True
        ws.append((w * scale).astype(jnp.bfloat16))             # BN scale folded, bf16
        bs.append(bias)                                         # bias stays f32
        relus.append(relu)                                      # static python bool
    return {"w": ws, "b": bs}, tuple(relus), key


# ----------------------------------------------------------------------------- main

if __name__ == "__main__":
    B, P, IN_DIM, N_OUT, K = 2, 16, 4, 8, 4
    FEAT_DIMS = ((32, 32), (64,))       # feat_dims for ('dgcnn', 'sa-global')
    OUT_MLP = [32]                      # out_mlp dims

    key = jax.random.PRNGKey(0)
    key, kx, kp = jax.random.split(key, 3)
    x = jax.random.normal(kx, (B, P, IN_DIM), jnp.float32)      # data.x (dense layout)
    pos = jax.random.normal(kp, (B, P, 3), jnp.float32)         # data.pos

    pkey = jax.random.PRNGKey(1)
    # dims per _get_input_dim: dgcnn step0 -> [2*in_dim] + feat_dims[0];
    # sa-global step1 -> [feat_dims[0][-1] + 3] + feat_dims[1];
    # final mlp -> [feat_dims[-1][-1]] + out_mlp + [n_out], plain_last=True.
    dgcnn_mlp, dgcnn_relus, pkey = make_mlp_params(pkey, [2 * IN_DIM] + list(FEAT_DIMS[0]))
    sa_mlp, sa_relus, pkey = make_mlp_params(pkey, [FEAT_DIMS[0][-1] + 3] + list(FEAT_DIMS[1]))
    head_mlp, head_relus, pkey = make_mlp_params(
        pkey, [FEAT_DIMS[-1][-1]] + OUT_MLP + [N_OUT], plain_last=True)
    params = {"dgcnn": dgcnn_mlp, "sa_global": sa_mlp, "final": head_mlp}

    fwd = jax.jit(functools.partial(
        model_forward, k=K, dgcnn_relus=dgcnn_relus, sa_relus=sa_relus,
        head_relus=head_relus))
    out = jax.block_until_ready(fwd(params, x, pos))

    assert out.shape == (B, N_OUT), out.shape
    assert out.dtype == jnp.float32
    assert bool(jnp.all(jnp.isfinite(out)))
    print("KERNEL_OK")
</pallas_src>

<mosaic_0001>
module attributes {stable_mosaic.version = 11 : i64} {
  func.func @_dgcnn_knn_kernel(%arg0: i32, %arg1: i32, %arg2: memref<1x3x16xf32, #tpu.memory_space<vmem>>, %arg3: memref<1x16x3xf32, #tpu.memory_space<vmem>>, %arg4: memref<1x16x4xf32, #tpu.memory_space<vmem>>, %arg5: memref<1x16x4xf32, #tpu.memory_space<vmem>>, %arg6: memref<4x32xbf16, #tpu.memory_space<vmem>>, %arg7: memref<4x32xbf16, #tpu.memory_space<vmem>>, %arg8: memref<32x32xbf16, #tpu.memory_space<vmem>>, %arg9: memref<1x32xf32, #tpu.memory_space<vmem>>, %arg10: memref<1x32xf32, #tpu.memory_space<vmem>>, %arg11: memref<1x16x32xf32, #tpu.memory_space<vmem>>) attributes {dimension_semantics = [#tpu.dimension_semantics<parallel>, #tpu.dimension_semantics<parallel>], iteration_bounds = array<i64: 2, 1>, scalar_prefetch = 0 : i64, scratch_operands = 0 : i64, tpu.core_type = #tpu.core_type<tc>, window_params = [{transform_indices = @transform_0, window_bounds = array<i64: 1, 3, 16>}, {transform_indices = @transform_1, window_bounds = array<i64: 1, 16, 3>}, {transform_indices = @transform_2, window_bounds = array<i64: 1, 16, 4>}, {transform_indices = @transform_3, window_bounds = array<i64: 1, 16, 4>}, {pipeline_mode = #tpu.pipeline_mode<synchronous>, transform_indices = @transform_4, window_bounds = array<i64: 4, 32>}, {pipeline_mode = #tpu.pipeline_mode<synchronous>, transform_indices = @transform_5, window_bounds = array<i64: 4, 32>}, {pipeline_mode = #tpu.pipeline_mode<synchronous>, transform_indices = @transform_6, window_bounds = array<i64: 32, 32>}, {pipeline_mode = #tpu.pipeline_mode<synchronous>, transform_indices = @transform_7, window_bounds = array<i64: 1, 32>}, {pipeline_mode = #tpu.pipeline_mode<synchronous>, transform_indices = @transform_8, window_bounds = array<i64: 1, 32>}, {transform_indices = @transform_9, window_bounds = array<i64: 1, 16, 32>}]} {
    %c0 = arith.constant 0 : index
    %c0_0 = arith.constant 0 : index
    %c0_1 = arith.constant 0 : index
    %0 = vector.load %arg2[%c0, %c0_0, %c0_1] : memref<1x3x16xf32, #tpu.memory_space<vmem>>, vector<1x3x16xf32>
    %1 = vector.shape_cast %0 : vector<1x3x16xf32> to vector<3x16xf32>
    %c0_2 = arith.constant 0 : index
    %c0_3 = arith.constant 0 : index
    %c0_4 = arith.constant 0 : index
    %2 = vector.load %arg3[%c0_2, %c0_3, %c0_4] : memref<1x16x3xf32, #tpu.memory_space<vmem>>, vector<1x16x3xf32>
    %3 = vector.shape_cast %2 : vector<1x16x3xf32> to vector<16x3xf32>
    %c0_5 = arith.constant 0 : index
    %c0_6 = arith.constant 0 : index
    %c0_7 = arith.constant 0 : index
    %4 = vector.load %arg4[%c0_5, %c0_6, %c0_7] : memref<1x16x4xf32, #tpu.memory_space<vmem>>, vector<1x16x4xf32>
    %5 = vector.shape_cast %4 : vector<1x16x4xf32> to vector<16x4xf32>
    %c0_8 = arith.constant 0 : index
    %c0_9 = arith.constant 0 : index
    %c0_10 = arith.constant 0 : index
    %6 = vector.load %arg5[%c0_8, %c0_9, %c0_10] : memref<1x16x4xf32, #tpu.memory_space<vmem>>, vector<1x16x4xf32>
    %7 = vector.shape_cast %6 : vector<1x16x4xf32> to vector<16x4xf32>
    %8 = arith.mulf %3, %3 : vector<16x3xf32>
    %cst = arith.constant dense<0.000000e+00> : vector<16xf32>
    %9 = vector.multi_reduction <add>, %8, %cst [1] : vector<16x3xf32> to vector<16xf32>
    %10 = vector.shape_cast %9 : vector<16xf32> to vector<16x1xf32>
    %11 = arith.mulf %1, %1 : vector<3x16xf32>
    %cst_11 = arith.constant dense<0.000000e+00> : vector<16xf32>
    %12 = vector.multi_reduction <add>, %11, %cst_11 [0] : vector<3x16xf32> to vector<16xf32>
    %13 = vector.shape_cast %12 : vector<16xf32> to vector<1x16xf32>
    %cst_12 = arith.constant dense<0.000000e+00> : vector<16x16xf32>
    %14 = tpu.matmul %3, %1, %cst_12 {dimension_numbers = #tpu.dot_dimension_numbers<[1], [0], [0], [1], [0, 0, 1, 1], [], []>} : vector<16x3xf32>, vector<3x16xf32>, vector<16x16xf32> -> vector<16x16xf32>
    %15 = vector.broadcast %10 : vector<16x1xf32> to vector<16x16xf32>
    %16 = vector.broadcast %13 : vector<1x16xf32> to vector<16x16xf32>
    %17 = arith.addf %15, %16 : vector<16x16xf32>
    %cst_13 = arith.constant 2.000000e+00 : f32
    %18 = vector.broadcast %cst_13 : f32 to vector<16x16xf32>
    %19 = arith.mulf %18, %14 : vector<16x16xf32>
    %20 = arith.subf %17, %19 : vector<16x16xf32>
    %21 = tpu.iota {dimensions = array<i32: 0>} : vector<16x16xi32>
    %c16_i32 = arith.constant 16 : i32
    %22 = arith.muli %arg1, %c16_i32 : i32
    %23 = vector.broadcast %22 : i32 to vector<16x16xi32>
    %24 = arith.addi %21, %23 : vector<16x16xi32>
    %25 = tpu.iota {dimensions = array<i32: 1>} : vector<16x16xi32>
    %26 = arith.cmpi eq, %24, %25 : vector<16x16xi32>
    %cst_14 = arith.constant 1.000000e+30 : f32
    %27 = vector.broadcast %cst_14 : f32 to vector<16x16xf32>
    %28 = arith.select %26, %27, %20 : vector<16x16xi1>, vector<16x16xf32>
    %29 = arith.sitofp %25 : vector<16x16xi32> to vector<16x16xf32>
    %30 = arith.truncf %5 : vector<16x4xf32> to vector<16x4xbf16>
    %c0_15 = arith.constant 0 : index
    %c0_16 = arith.constant 0 : index
    %31 = vector.load %arg6[%c0_15, %c0_16] : memref<4x32xbf16, #tpu.memory_space<vmem>>, vector<4x32xbf16>
    %cst_17 = arith.constant dense<0.000000e+00> : vector<16x32xf32>
    %32 = tpu.matmul %30, %31, %cst_17 {dimension_numbers = #tpu.dot_dimension_numbers<[1], [0], [0], [1], [0, 0, 1, 1], [], []>} : vector<16x4xbf16>, vector<4x32xbf16>, vector<16x32xf32> -> vector<16x32xf32>
    %33 = arith.truncf %32 : vector<16x32xf32> to vector<16x32xbf16>
    %34 = arith.truncf %7 : vector<16x4xf32> to vector<16x4xbf16>
    %c0_18 = arith.constant 0 : index
    %c0_19 = arith.constant 0 : index
    %35 = vector.load %arg7[%c0_18, %c0_19] : memref<4x32xbf16, #tpu.memory_space<vmem>>, vector<4x32xbf16>
    %cst_20 = arith.constant dense<0.000000e+00> : vector<16x32xf32>
    %36 = tpu.matmul %34, %35, %cst_20 {dimension_numbers = #tpu.dot_dimension_numbers<[1], [0], [0], [1], [0, 0, 1, 1], [], []>} : vector<16x4xbf16>, vector<4x32xbf16>, vector<16x32xf32> -> vector<16x32xf32>
    %c0_21 = arith.constant 0 : index
    %c0_22 = arith.constant 0 : index
    %37 = vector.load %arg9[%c0_21, %c0_22] : memref<1x32xf32, #tpu.memory_space<vmem>>, vector<1x32xf32>
    %38 = vector.broadcast %37 : vector<1x32xf32> to vector<16x32xf32>
    %39 = arith.addf %36, %38 : vector<16x32xf32>
    %c0_23 = arith.constant 0 : index
    %c0_24 = arith.constant 0 : index
    %40 = vector.load %arg8[%c0_23, %c0_24] : memref<32x32xbf16, #tpu.memory_space<vmem>>, vector<32x32xbf16>
    %c0_25 = arith.constant 0 : index
    %c0_26 = arith.constant 0 : index
    %41 = vector.load %arg10[%c0_25, %c0_26] : memref<1x32xf32, #tpu.memory_space<vmem>>, vector<1x32xf32>
    %42 = vector.shape_cast %41 : vector<1x32xf32> to vector<1x32xf32>
    %43 = vector.broadcast %42 : vector<1x32xf32> to vector<16x32xf32>
    %cst_27 = arith.constant dense<0x7F800000> : vector<16xf32>
    %44 = vector.multi_reduction <minimumf>, %28, %cst_27 [1] : vector<16x16xf32> to vector<16xf32>
    %45 = vector.shape_cast %44 : vector<16xf32> to vector<16x1xf32>
    %46 = vector.broadcast %45 : vector<16x1xf32> to vector<16x16xf32>
    %47 = arith.cmpf ole, %28, %46 : vector<16x16xf32>
    %cst_28 = arith.constant 1.600000e+01 : f32
    %48 = vector.broadcast %cst_28 : f32 to vector<16x16xf32>
    %49 = arith.select %47, %29, %48 : vector<16x16xi1>, vector<16x16xf32>
    %cst_29 = arith.constant dense<0x7F800000> : vector<16xf32>
    %50 = vector.multi_reduction <minimumf>, %49, %cst_29 [1] : vector<16x16xf32> to vector<16xf32>
    %51 = vector.shape_cast %50 : vector<16xf32> to vector<16x1xf32>
    %52 = vector.broadcast %51 : vector<16x1xf32> to vector<16x16xf32>
    %53 = arith.cmpf oeq, %29, %52 : vector<16x16xf32>
    %cst_30 = arith.constant 1.000000e+30 : f32
    %54 = vector.broadcast %cst_30 : f32 to vector<16x16xf32>
    %55 = arith.select %53, %54, %28 : vector<16x16xi1>, vector<16x16xf32>
    %56 = arith.extui %53 : vector<16x16xi1> to vector<16x16xi32>
    %57 = arith.sitofp %56 : vector<16x16xi32> to vector<16x16xf32>
    %58 = arith.truncf %57 : vector<16x16xf32> to vector<16x16xbf16>
    %cst_31 = arith.constant dense<0.000000e+00> : vector<16x32xf32>
    %59 = tpu.matmul %58, %33, %cst_31 {dimension_numbers = #tpu.dot_dimension_numbers<[1], [0], [0], [1], [0, 0, 1, 1], [], []>} : vector<16x16xbf16>, vector<16x32xbf16>, vector<16x32xf32> -> vector<16x32xf32>
    %60 = arith.addf %59, %39 : vector<16x32xf32>
    %cst_32 = arith.constant 0.000000e+00 : f32
    %61 = vector.broadcast %cst_32 : f32 to vector<16x32xf32>
    %62 = arith.maximumf %60, %61 : vector<16x32xf32>
    %63 = arith.truncf %62 : vector<16x32xf32> to vector<16x32xbf16>
    %cst_33 = arith.constant dense<0.000000e+00> : vector<16x32xf32>
    %64 = tpu.matmul %63, %40, %cst_33 {dimension_numbers = #tpu.dot_dimension_numbers<[1], [0], [0], [1], [0, 0, 1, 1], [], []>} : vector<16x32xbf16>, vector<32x32xbf16>, vector<16x32xf32> -> vector<16x32xf32>
    %65 = arith.addf %64, %43 : vector<16x32xf32>
    %cst_34 = arith.constant 0.000000e+00 : f32
    %66 = vector.broadcast %cst_34 : f32 to vector<16x32xf32>
    %67 = arith.maximumf %65, %66 : vector<16x32xf32>
    %cst_35 = arith.constant dense<0x7F800000> : vector<16xf32>
    %68 = vector.multi_reduction <minimumf>, %55, %cst_35 [1] : vector<16x16xf32> to vector<16xf32>
    %69 = vector.shape_cast %68 : vector<16xf32> to vector<16x1xf32>
    %70 = vector.broadcast %69 : vector<16x1xf32> to vector<16x16xf32>
    %71 = arith.cmpf ole, %55, %70 : vector<16x16xf32>
    %cst_36 = arith.constant 1.600000e+01 : f32
    %72 = vector.broadcast %cst_36 : f32 to vector<16x16xf32>
    %73 = arith.select %71, %29, %72 : vector<16x16xi1>, vector<16x16xf32>
    %cst_37 = arith.constant dense<0x7F800000> : vector<16xf32>
    %74 = vector.multi_reduction <minimumf>, %73, %cst_37 [1] : vector<16x16xf32> to vector<16xf32>
    %75 = vector.shape_cast %74 : vector<16xf32> to vector<16x1xf32>
    %76 = vector.broadcast %75 : vector<16x1xf32> to vector<16x16xf32>
    %77 = arith.cmpf oeq, %29, %76 : vector<16x16xf32>
    %cst_38 = arith.constant 1.000000e+30 : f32
    %78 = vector.broadcast %cst_38 : f32 to vector<16x16xf32>
    %79 = arith.select %77, %78, %55 : vector<16x16xi1>, vector<16x16xf32>
    %80 = arith.extui %77 : vector<16x16xi1> to vector<16x16xi32>
    %81 = arith.sitofp %80 : vector<16x16xi32> to vector<16x16xf32>
    %82 = arith.truncf %81 : vector<16x16xf32> to vector<16x16xbf16>
    %cst_39 = arith.constant dense<0.000000e+00> : vector<16x32xf32>
    %83 = tpu.matmul %82, %33, %cst_39 {dimension_numbers = #tpu.dot_dimension_numbers<[1], [0], [0], [1], [0, 0, 1, 1], [], []>} : vector<16x16xbf16>, vector<16x32xbf16>, vector<16x32xf32> -> vector<16x32xf32>
    %84 = arith.addf %83, %39 : vector<16x32xf32>
    %cst_40 = arith.constant 0.000000e+00 : f32
    %85 = vector.broadcast %cst_40 : f32 to vector<16x32xf32>
    %86 = arith.maximumf %84, %85 : vector<16x32xf32>
    %87 = arith.truncf %86 : vector<16x32xf32> to vector<16x32xbf16>
    %cst_41 = arith.constant dense<0.000000e+00> : vector<16x32xf32>
    %88 = tpu.matmul %87, %40, %cst_41 {dimension_numbers = #tpu.dot_dimension_numbers<[1], [0], [0], [1], [0, 0, 1, 1], [], []>} : vector<16x32xbf16>, vector<32x32xbf16>, vector<16x32xf32> -> vector<16x32xf32>
    %89 = arith.addf %88, %43 : vector<16x32xf32>
    %cst_42 = arith.constant 0.000000e+00 : f32
    %90 = vector.broadcast %cst_42 : f32 to vector<16x32xf32>
    %91 = arith.maximumf %89, %90 : vector<16x32xf32>
    %92 = arith.maximumf %67, %91 : vector<16x32xf32>
    %cst_43 = arith.constant dense<0x7F800000> : vector<16xf32>
    %93 = vector.multi_reduction <minimumf>, %79, %cst_43 [1] : vector<16x16xf32> to vector<16xf32>
    %94 = vector.shape_cast %93 : vector<16xf32> to vector<16x1xf32>
    %95 = vector.broadcast %94 : vector<16x1xf32> to vector<16x16xf32>
    %96 = arith.cmpf ole, %79, %95 : vector<16x16xf32>
    %cst_44 = arith.constant 1.600000e+01 : f32
    %97 = vector.broadcast %cst_44 : f32 to vector<16x16xf32>
    %98 = arith.select %96, %29, %97 : vector<16x16xi1>, vector<16x16xf32>
    %cst_45 = arith.constant dense<0x7F800000> : vector<16xf32>
    %99 = vector.multi_reduction <minimumf>, %98, %cst_45 [1] : vector<16x16xf32> to vector<16xf32>
    %100 = vector.shape_cast %99 : vector<16xf32> to vector<16x1xf32>
    %101 = vector.broadcast %100 : vector<16x1xf32> to vector<16x16xf32>
    %102 = arith.cmpf oeq, %29, %101 : vector<16x16xf32>
    %cst_46 = arith.constant 1.000000e+30 : f32
    %103 = vector.broadcast %cst_46 : f32 to vector<16x16xf32>
    %104 = arith.select %102, %103, %79 : vector<16x16xi1>, vector<16x16xf32>
    %105 = arith.extui %102 : vector<16x16xi1> to vector<16x16xi32>
    %106 = arith.sitofp %105 : vector<16x16xi32> to vector<16x16xf32>
    %107 = arith.truncf %106 : vector<16x16xf32> to vector<16x16xbf16>
    %cst_47 = arith.constant dense<0.000000e+00> : vector<16x32xf32>
    %108 = tpu.matmul %107, %33, %cst_47 {dimension_numbers = #tpu.dot_dimension_numbers<[1], [0], [0], [1], [0, 0, 1, 1], [], []>} : vector<16x16xbf16>, vector<16x32xbf16>, vector<16x32xf32> -> vector<16x32xf32>
    %109 = arith.addf %108, %39 : vector<16x32xf32>
    %cst_48 = arith.constant 0.000000e+00 : f32
    %110 = vector.broadcast %cst_48 : f32 to vector<16x32xf32>
    %111 = arith.maximumf %109, %110 : vector<16x32xf32>
    %112 = arith.truncf %111 : vector<16x32xf32> to vector<16x32xbf16>
    %cst_49 = arith.constant dense<0.000000e+00> : vector<16x32xf32>
    %113 = tpu.matmul %112, %40, %cst_49 {dimension_numbers = #tpu.dot_dimension_numbers<[1], [0], [0], [1], [0, 0, 1, 1], [], []>} : vector<16x32xbf16>, vector<32x32xbf16>, vector<16x32xf32> -> vector<16x32xf32>
    %114 = arith.addf %113, %43 : vector<16x32xf32>
    %cst_50 = arith.constant 0.000000e+00 : f32
    %115 = vector.broadcast %cst_50 : f32 to vector<16x32xf32>
    %116 = arith.maximumf %114, %115 : vector<16x32xf32>
    %117 = arith.maximumf %92, %116 : vector<16x32xf32>
    %cst_51 = arith.constant dense<0x7F800000> : vector<16xf32>
    %118 = vector.multi_reduction <minimumf>, %104, %cst_51 [1] : vector<16x16xf32> to vector<16xf32>
    %119 = vector.shape_cast %118 : vector<16xf32> to vector<16x1xf32>
    %120 = vector.broadcast %119 : vector<16x1xf32> to vector<16x16xf32>
    %121 = arith.cmpf ole, %104, %120 : vector<16x16xf32>
    %cst_52 = arith.constant 1.600000e+01 : f32
    %122 = vector.broadcast %cst_52 : f32 to vector<16x16xf32>
    %123 = arith.select %121, %29, %122 : vector<16x16xi1>, vector<16x16xf32>
    %cst_53 = arith.constant dense<0x7F800000> : vector<16xf32>
    %124 = vector.multi_reduction <minimumf>, %123, %cst_53 [1] : vector<16x16xf32> to vector<16xf32>
    %125 = vector.shape_cast %124 : vector<16xf32> to vector<16x1xf32>
    %126 = vector.broadcast %125 : vector<16x1xf32> to vector<16x16xf32>
    %127 = arith.cmpf oeq, %29, %126 : vector<16x16xf32>
    %128 = arith.extui %127 : vector<16x16xi1> to vector<16x16xi32>
    %129 = arith.sitofp %128 : vector<16x16xi32> to vector<16x16xf32>
    %130 = arith.truncf %129 : vector<16x16xf32> to vector<16x16xbf16>
    %cst_54 = arith.constant dense<0.000000e+00> : vector<16x32xf32>
    %131 = tpu.matmul %130, %33, %cst_54 {dimension_numbers = #tpu.dot_dimension_numbers<[1], [0], [0], [1], [0, 0, 1, 1], [], []>} : vector<16x16xbf16>, vector<16x32xbf16>, vector<16x32xf32> -> vector<16x32xf32>
    %132 = arith.addf %131, %39 : vector<16x32xf32>
    %cst_55 = arith.constant 0.000000e+00 : f32
    %133 = vector.broadcast %cst_55 : f32 to vector<16x32xf32>
    %134 = arith.maximumf %132, %133 : vector<16x32xf32>
    %135 = arith.truncf %134 : vector<16x32xf32> to vector<16x32xbf16>
    %cst_56 = arith.constant dense<0.000000e+00> : vector<16x32xf32>
    %136 = tpu.matmul %135, %40, %cst_56 {dimension_numbers = #tpu.dot_dimension_numbers<[1], [0], [0], [1], [0, 0, 1, 1], [], []>} : vector<16x32xbf16>, vector<32x32xbf16>, vector<16x32xf32> -> vector<16x32xf32>
    %137 = arith.addf %136, %43 : vector<16x32xf32>
    %cst_57 = arith.constant 0.000000e+00 : f32
    %138 = vector.broadcast %cst_57 : f32 to vector<16x32xf32>
    %139 = arith.maximumf %137, %138 : vector<16x32xf32>
    %140 = arith.maximumf %117, %139 : vector<16x32xf32>
    %c0_58 = arith.constant 0 : index
    %c0_59 = arith.constant 0 : index
    %c0_60 = arith.constant 0 : index
    %141 = vector.load %arg11[%c0_58, %c0_59, %c0_60] : memref<1x16x32xf32, #tpu.memory_space<vmem>>, vector<1x16x32xf32>
    %142 = vector.shape_cast %141 : vector<1x16x32xf32> to vector<16x32xf32>
    %143 = vector.shape_cast %140 : vector<16x32xf32> to vector<1x16x32xf32>
    tpu.vector_store %arg11[%c0_58, %c0_59, %c0_60], %143 {strides = array<i32>} : memref<1x16x32xf32, #tpu.memory_space<vmem>>, vector<1x16x32xf32>,
    return
  }
  func.func @transform_0(%arg0: i32, %arg1: i32) -> (i32, i32, i32) {
    %c0_i32 = arith.constant 0 : i32
    %c0_i32_0 = arith.constant 0 : i32
    %c0_i32_1 = arith.constant 0 : i32
    return %arg0, %c0_i32, %c0_i32_0 : i32, i32, i32
  }
  func.func @transform_1(%arg0: i32, %arg1: i32) -> (i32, i32, i32) {
    %c0_i32 = arith.constant 0 : i32
    %c0_i32_0 = arith.constant 0 : i32
    return %arg0, %arg1, %c0_i32 : i32, i32, i32
  }
  func.func @transform_2(%arg0: i32, %arg1: i32) -> (i32, i32, i32) {
    %c0_i32 = arith.constant 0 : i32
    %c0_i32_0 = arith.constant 0 : i32
    %c0_i32_1 = arith.constant 0 : i32
    return %arg0, %c0_i32, %c0_i32_0 : i32, i32, i32
  }
  func.func @transform_3(%arg0: i32, %arg1: i32) -> (i32, i32, i32) {
    %c0_i32 = arith.constant 0 : i32
    %c0_i32_0 = arith.constant 0 : i32
    return %arg0, %arg1, %c0_i32 : i32, i32, i32
  }
  func.func @transform_4(%arg0: i32, %arg1: i32) -> (i32, i32) {
    %c0_i32 = arith.constant 0 : i32
    %c0_i32_0 = arith.constant 0 : i32
    %c0_i32_1 = arith.constant 0 : i32
    return %c0_i32, %c0_i32_0 : i32, i32
  }
  func.func @transform_5(%arg0: i32, %arg1: i32) -> (i32, i32) {
    %c0_i32 = arith.constant 0 : i32
    %c0_i32_0 = arith.constant 0 : i32
    %c0_i32_1 = arith.constant 0 : i32
    return %c0_i32, %c0_i32_0 : i32, i32
  }
  func.func @transform_6(%arg0: i32, %arg1: i32) -> (i32, i32) {
    %c0_i32 = arith.constant 0 : i32
    %c0_i32_0 = arith.constant 0 : i32
    %c0_i32_1 = arith.constant 0 : i32
    return %c0_i32, %c0_i32_0 : i32, i32
  }
  func.func @transform_7(%arg0: i32, %arg1: i32) -> (i32, i32) {
    %c0_i32 = arith.constant 0 : i32
    %c0_i32_0 = arith.constant 0 : i32
    %c0_i32_1 = arith.constant 0 : i32
    return %c0_i32, %c0_i32_0 : i32, i32
  }
  func.func @transform_8(%arg0: i32, %arg1: i32) -> (i32, i32) {
    %c0_i32 = arith.constant 0 : i32
    %c0_i32_0 = arith.constant 0 : i32
    %c0_i32_1 = arith.constant 0 : i32
    return %c0_i32, %c0_i32_0 : i32, i32
  }
  func.func @transform_9(%arg0: i32, %arg1: i32) -> (i32, i32, i32) {
    %c0_i32 = arith.constant 0 : i32
    %c0_i32_0 = arith.constant 0 : i32
    return %arg0, %arg1, %c0_i32 : i32, i32, i32
  }
}

module attributes {stable_mosaic.version = 11 : i64} {
  func.func @_sa_head_kernel(%arg0: i32, %arg1: i32, %arg2: memref<1x16x32xf32, #tpu.memory_space<vmem>>, %arg3: memref<1x16x3xf32, #tpu.memory_space<vmem>>, %arg4: memref<32x64xbf16, #tpu.memory_space<vmem>>, %arg5: memref<3x64xbf16, #tpu.memory_space<vmem>>, %arg6: memref<1x64xf32, #tpu.memory_space<vmem>>, %arg7: memref<64x32xbf16, #tpu.memory_space<vmem>>, %arg8: memref<32x8xbf16, #tpu.memory_space<vmem>>, %arg9: memref<1x32xf32, #tpu.memory_space<vmem>>, %arg10: memref<1x8xf32, #tpu.memory_space<vmem>>, %arg11: memref<1x1x8xf32, #tpu.memory_space<vmem>>, %arg12: memref<1x64xf32, #tpu.memory_space<vmem>>) attributes {dimension_semantics = [#tpu.dimension_semantics<parallel>, #tpu.dimension_semantics<arbitrary>], iteration_bounds = array<i64: 2, 1>, scalar_prefetch = 0 : i64, scratch_operands = 1 : i64, tpu.core_type = #tpu.core_type<tc>, window_params = [{transform_indices = @transform_0, window_bounds = array<i64: 1, 16, 32>}, {transform_indices = @transform_1, window_bounds = array<i64: 1, 16, 3>}, {pipeline_mode = #tpu.pipeline_mode<synchronous>, transform_indices = @transform_2, window_bounds = array<i64: 32, 64>}, {pipeline_mode = #tpu.pipeline_mode<synchronous>, transform_indices = @transform_3, window_bounds = array<i64: 3, 64>}, {pipeline_mode = #tpu.pipeline_mode<synchronous>, transform_indices = @transform_4, window_bounds = array<i64: 1, 64>}, {pipeline_mode = #tpu.pipeline_mode<synchronous>, transform_indices = @transform_5, window_bounds = array<i64: 64, 32>}, {pipeline_mode = #tpu.pipeline_mode<synchronous>, transform_indices = @transform_6, window_bounds = array<i64: 32, 8>}, {pipeline_mode = #tpu.pipeline_mode<synchronous>, transform_indices = @transform_7, window_bounds = array<i64: 1, 32>}, {pipeline_mode = #tpu.pipeline_mode<synchronous>, transform_indices = @transform_8, window_bounds = array<i64: 1, 8>}, {transform_indices = @transform_9, window_bounds = array<i64: 1, 1, 8>}]} {
    %c0 = arith.constant 0 : index
    %c0_0 = arith.constant 0 : index
    %c0_1 = arith.constant 0 : index
    %0 = vector.load %arg2[%c0, %c0_0, %c0_1] : memref<1x16x32xf32, #tpu.memory_space<vmem>>, vector<1x16x32xf32>
    %1 = vector.shape_cast %0 : vector<1x16x32xf32> to vector<16x32xf32>
    %2 = arith.truncf %1 : vector<16x32xf32> to vector<16x32xbf16>
    %c0_2 = arith.constant 0 : index
    %c0_3 = arith.constant 0 : index
    %3 = vector.load %arg4[%c0_2, %c0_3] : memref<32x64xbf16, #tpu.memory_space<vmem>>, vector<32x64xbf16>
    %cst = arith.constant dense<0.000000e+00> : vector<16x64xf32>
    %4 = tpu.matmul %2, %3, %cst {dimension_numbers = #tpu.dot_dimension_numbers<[1], [0], [0], [1], [0, 0, 1, 1], [], []>} : vector<16x32xbf16>, vector<32x64xbf16>, vector<16x64xf32> -> vector<16x64xf32>
    %c0_4 = arith.constant 0 : index
    %c0_5 = arith.constant 0 : index
    %c0_6 = arith.constant 0 : index
    %5 = vector.load %arg3[%c0_4, %c0_5, %c0_6] : memref<1x16x3xf32, #tpu.memory_space<vmem>>, vector<1x16x3xf32>
    %6 = vector.shape_cast %5 : vector<1x16x3xf32> to vector<16x3xf32>
    %7 = arith.truncf %6 : vector<16x3xf32> to vector<16x3xbf16>
    %c0_7 = arith.constant 0 : index
    %c0_8 = arith.constant 0 : index
    %8 = vector.load %arg5[%c0_7, %c0_8] : memref<3x64xbf16, #tpu.memory_space<vmem>>, vector<3x64xbf16>
    %cst_9 = arith.constant dense<0.000000e+00> : vector<16x64xf32>
    %9 = tpu.matmul %7, %8, %cst_9 {dimension_numbers = #tpu.dot_dimension_numbers<[1], [0], [0], [1], [0, 0, 1, 1], [], []>} : vector<16x3xbf16>, vector<3x64xbf16>, vector<16x64xf32> -> vector<16x64xf32>
    %10 = arith.addf %4, %9 : vector<16x64xf32>
    %c0_10 = arith.constant 0 : index
    %c0_11 = arith.constant 0 : index
    %11 = vector.load %arg6[%c0_10, %c0_11] : memref<1x64xf32, #tpu.memory_space<vmem>>, vector<1x64xf32>
    %12 = vector.broadcast %11 : vector<1x64xf32> to vector<16x64xf32>
    %13 = arith.addf %10, %12 : vector<16x64xf32>
    %cst_12 = arith.constant 0.000000e+00 : f32
    %14 = vector.broadcast %cst_12 : f32 to vector<16x64xf32>
    %15 = arith.maximumf %13, %14 : vector<16x64xf32>
    %cst_13 = arith.constant dense<0xFF800000> : vector<64xf32>
    %16 = vector.multi_reduction <maximumf>, %15, %cst_13 [0] : vector<16x64xf32> to vector<64xf32>
    %17 = vector.shape_cast %16 : vector<64xf32> to vector<1x64xf32>
    %c0_i32 = arith.constant 0 : i32
    %18 = arith.cmpi eq, %arg1, %c0_i32 : i32
    %19 = arith.extui %18 : i1 to i32
    %c0_i32_14 = arith.constant 0 : i32
    %20 = arith.cmpi ne, %19, %c0_i32_14 : i32
    scf.if %20 {
      %c0_19 = arith.constant 0 : index
      %c0_20 = arith.constant 0 : index
      %27 = vector.load %arg12[%c0_19, %c0_20] : memref<1x64xf32, #tpu.memory_space<vmem>>, vector<1x64xf32>
      tpu.vector_store %arg12[%c0_19, %c0_20], %17 {strides = array<i32>} : memref<1x64xf32, #tpu.memory_space<vmem>>, vector<1x64xf32>,
    } else {
    }
    %c0_i32_15 = arith.constant 0 : i32
    %21 = arith.cmpi sgt, %arg1, %c0_i32_15 : i32
    %22 = arith.extui %21 : i1 to i32
    %c0_i32_16 = arith.constant 0 : i32
    %23 = arith.cmpi ne, %22, %c0_i32_16 : i32
    scf.if %23 {
      %c0_19 = arith.constant 0 : index
      %c0_20 = arith.constant 0 : index
      %27 = vector.load %arg12[%c0_19, %c0_20] : memref<1x64xf32, #tpu.memory_space<vmem>>, vector<1x64xf32>
      %28 = arith.maximumf %27, %17 : vector<1x64xf32>
      %c0_21 = arith.constant 0 : index
      %c0_22 = arith.constant 0 : index
      %29 = vector.load %arg12[%c0_21, %c0_22] : memref<1x64xf32, #tpu.memory_space<vmem>>, vector<1x64xf32>
      tpu.vector_store %arg12[%c0_21, %c0_22], %28 {strides = array<i32>} : memref<1x64xf32, #tpu.memory_space<vmem>>, vector<1x64xf32>,
    } else {
    }
    %c0_i32_17 = arith.constant 0 : i32
    %24 = arith.cmpi eq, %arg1, %c0_i32_17 : i32
    %25 = arith.extui %24 : i1 to i32
    %c0_i32_18 = arith.constant 0 : i32
    %26 = arith.cmpi ne, %25, %c0_i32_18 : i32
    scf.if %26 {
      %c0_19 = arith.constant 0 : index
      %c0_20 = arith.constant 0 : index
      %27 = vector.load %arg12[%c0_19, %c0_20] : memref<1x64xf32, #tpu.memory_space<vmem>>, vector<1x64xf32>
      %28 = arith.truncf %27 : vector<1x64xf32> to vector<1x64xbf16>
      %c0_21 = arith.constant 0 : index
      %c0_22 = arith.constant 0 : index
      %29 = vector.load %arg7[%c0_21, %c0_22] : memref<64x32xbf16, #tpu.memory_space<vmem>>, vector<64x32xbf16>
      %cst_23 = arith.constant dense<0.000000e+00> : vector<1x32xf32>
      %30 = tpu.matmul %28, %29, %cst_23 {dimension_numbers = #tpu.dot_dimension_numbers<[1], [0], [0], [1], [0, 0, 1, 1], [], []>} : vector<1x64xbf16>, vector<64x32xbf16>, vector<1x32xf32> -> vector<1x32xf32>
      %c0_24 = arith.constant 0 : index
      %c0_25 = arith.constant 0 : index
      %31 = vector.load %arg9[%c0_24, %c0_25] : memref<1x32xf32, #tpu.memory_space<vmem>>, vector<1x32xf32>
      %32 = arith.addf %30, %31 : vector<1x32xf32>
      %cst_26 = arith.constant 0.000000e+00 : f32
      %33 = vector.broadcast %cst_26 : f32 to vector<1x32xf32>
      %34 = arith.maximumf %32, %33 : vector<1x32xf32>
      %35 = arith.truncf %34 : vector<1x32xf32> to vector<1x32xbf16>
      %c0_27 = arith.constant 0 : index
      %c0_28 = arith.constant 0 : index
      %36 = vector.load %arg8[%c0_27, %c0_28] : memref<32x8xbf16, #tpu.memory_space<vmem>>, vector<32x8xbf16>
      %cst_29 = arith.constant dense<0.000000e+00> : vector<1x8xf32>
      %37 = tpu.matmul %35, %36, %cst_29 {dimension_numbers = #tpu.dot_dimension_numbers<[1], [0], [0], [1], [0, 0, 1, 1], [], []>} : vector<1x32xbf16>, vector<32x8xbf16>, vector<1x8xf32> -> vector<1x8xf32>
      %c0_30 = arith.constant 0 : index
      %c0_31 = arith.constant 0 : index
      %38 = vector.load %arg10[%c0_30, %c0_31] : memref<1x8xf32, #tpu.memory_space<vmem>>, vector<1x8xf32>
      %39 = arith.addf %37, %38 : vector<1x8xf32>
      %c0_32 = arith.constant 0 : index
      %c0_33 = arith.constant 0 : index
      %c0_34 = arith.constant 0 : index
      %40 = vector.load %arg11[%c0_32, %c0_33, %c0_34] : memref<1x1x8xf32, #tpu.memory_space<vmem>>, vector<1x1x8xf32>
      %41 = vector.shape_cast %40 : vector<1x1x8xf32> to vector<1x8xf32>
      %42 = vector.shape_cast %39 : vector<1x8xf32> to vector<1x1x8xf32>
      tpu.vector_store %arg11[%c0_32, %c0_33, %c0_34], %42 {strides = array<i32>} : memref<1x1x8xf32, #tpu.memory_space<vmem>>, vector<1x1x8xf32>,
    } else {
    }
    return
  }
  func.func @transform_0(%arg0: i32, %arg1: i32) -> (i32, i32, i32) {
    %c0_i32 = arith.constant 0 : i32
    %c0_i32_0 = arith.constant 0 : i32
    return %arg0, %arg1, %c0_i32 : i32, i32, i32
  }
  func.func @transform_1(%arg0: i32, %arg1: i32) -> (i32, i32, i32) {
    %c0_i32 = arith.constant 0 : i32
    %c0_i32_0 = arith.constant 0 : i32
    return %arg0, %arg1, %c0_i32 : i32, i32, i32
  }
  func.func @transform_2(%arg0: i32, %arg1: i32) -> (i32, i32) {
    %c0_i32 = arith.constant 0 : i32
    %c0_i32_0 = arith.constant 0 : i32
    %c0_i32_1 = arith.constant 0 : i32
    return %c0_i32, %c0_i32_0 : i32, i32
  }
  func.func @transform_3(%arg0: i32, %arg1: i32) -> (i32, i32) {
    %c0_i32 = arith.constant 0 : i32
    %c0_i32_0 = arith.constant 0 : i32
    %c0_i32_1 = arith.constant 0 : i32
    return %c0_i32, %c0_i32_0 : i32, i32
  }
  func.func @transform_4(%arg0: i32, %arg1: i32) -> (i32, i32) {
    %c0_i32 = arith.constant 0 : i32
    %c0_i32_0 = arith.constant 0 : i32
    %c0_i32_1 = arith.constant 0 : i32
    return %c0_i32, %c0_i32_0 : i32, i32
  }
  func.func @transform_5(%arg0: i32, %arg1: i32) -> (i32, i32) {
    %c0_i32 = arith.constant 0 : i32
    %c0_i32_0 = arith.constant 0 : i32
    %c0_i32_1 = arith.constant 0 : i32
    return %c0_i32, %c0_i32_0 : i32, i32
  }
  func.func @transform_6(%arg0: i32, %arg1: i32) -> (i32, i32) {
    %c0_i32 = arith.constant 0 : i32
    %c0_i32_0 = arith.constant 0 : i32
    %c0_i32_1 = arith.constant 0 : i32
    return %c0_i32, %c0_i32_0 : i32, i32
  }
  func.func @transform_7(%arg0: i32, %arg1: i32) -> (i32, i32) {
    %c0_i32 = arith.constant 0 : i32
    %c0_i32_0 = arith.constant 0 : i32
    %c0_i32_1 = arith.constant 0 : i32
    return %c0_i32, %c0_i32_0 : i32, i32
  }
  func.func @transform_8(%arg0: i32, %arg1: i32) -> (i32, i32) {
    %c0_i32 = arith.constant 0 : i32
    %c0_i32_0 = arith.constant 0 : i32
    %c0_i32_1 = arith.constant 0 : i32
    return %c0_i32, %c0_i32_0 : i32, i32
  }
  func.func @transform_9(%arg0: i32, %arg1: i32) -> (i32, i32, i32) {
    %c0_i32 = arith.constant 0 : i32
    %c0_i32_0 = arith.constant 0 : i32
    %c0_i32_1 = arith.constant 0 : i32
    return %arg0, %c0_i32, %c0_i32_0 : i32, i32, i32
  }
}

</mosaic_0001>

<llo_original>
// kernel: model_forward.3
$region0: #{model_forward.3}
  #allocation0 [shape = 'u32[]', space=smem, size = 0x4, offset = 0x4, fixed_abs, tag = 'smem constant byte address 0x4 - core index']
  #allocation1 [shape = 'u32[144,128]{1,0:T(1,128)}', space=vmem, size = 0x12000, scoped, tag = 'internal scratch']
  #allocation2 [shape = 'f32[1,64]{1,0:T(1,128)}', space=vmem, size = 0x200, scoped, tag = 'scratch operand']
  %s0 = inlined_call_operand.vmem [shape: f32[2,16,32], index: 0, kind: input, shape index: {}]
  %s1 = inlined_call_operand.vmem [shape: f32[2,16,3], index: 1, kind: input, shape index: {}]
  %s2 = inlined_call_operand.vmem [shape: bf16[32,64], index: 2, kind: input, shape index: {}]
  %s3 = inlined_call_operand.vmem [shape: bf16[3,64], index: 3, kind: input, shape index: {}]
  %s4 = inlined_call_operand.vmem [shape: f32[1,64], index: 4, kind: input, shape index: {}]
  %s5 = inlined_call_operand.vmem [shape: bf16[64,32], index: 5, kind: input, shape index: {}]
  %s6 = inlined_call_operand.vmem [shape: bf16[32,8], index: 6, kind: input, shape index: {}]
  %s7 = inlined_call_operand.vmem [shape: f32[1,32], index: 7, kind: input, shape index: {}]
  %s8 = inlined_call_operand.vmem [shape: f32[1,8], index: 8, kind: input, shape index: {}]
  %s9 = inlined_call_operand.hbm [shape: f32[2,1,8], index: 9, kind: output, shape index: {}]
  %s10 = sld [smem:[#allocation0]]
  $region81: #{model_forward.3} parent=0
    _
  %s12 = ssub.s32 1, %s10
  %s13 = scalar_select 0, %s12, %s10
  $region1: #{model_forward.3} parent=0
    #allocation3 [shape = 'u8[1024]{0}', space=vmem, size = 0x400, scoped, tag = 'output window, operand 0']
    #allocation4 [shape = 's32[2]{0}', space=sflag, size = 0x8, scoped, tag = 'scoped memory for model_forward.3']
    %14 = vsyncpa [#allocation4], 0
    %s15 = scalar_lea.sflag [#allocation4], 1
    %16 = vsyncpa %s15, 0
    loop: start=0, step=1, limit=4
    $region2: #{model_forward.3} parent=1 // loop_pre_header
      _
    $region3: #{model_forward.3} parent=1 // loop_header
      %s18 = sphi 0, %s22
      %p19 = scmp.ge.s32.totalorder %s18, 4
      %s25 = sphi 0, %s37
      %s26 = sphi 0, %s33
      %s27 = sphi 0, %s25
      %s28 = sphi 0, %s26
      %s29 = sphi 0, %s27
      %s30 = sphi 0, %s28
      %s42 = sphi 0, %s44
      %s45 = sphi 0, %s42
      %s46 = sphi 0, %s45
      %s62 = sphi 0, %s46
      %s70 = sphi 0, %s72
      %s73 = sphi 0, %s70
      %s74 = sphi 0, %s73
      %s90 = sphi 0, %s74
      %s94 = sphi 0, %s94
      %s96 = sphi 0, %s94
      %s97 = sphi 0, %s96
      %s111 = sphi 0, %s97
      %s115 = sphi 0, %s115
      %s117 = sphi 0, %s115
      %s118 = sphi 0, %s117
      %s132 = sphi 0, %s118
      %s136 = sphi 0, %s136
      %s138 = sphi 0, %s136
      %s139 = sphi 0, %s138
      %s153 = sphi 0, %s139
      %s157 = sphi 0, %s157
      %s159 = sphi 0, %s157
      %s160 = sphi 0, %s159
      %s174 = sphi 0, %s160
      %s178 = sphi 0, %s178
      %s180 = sphi 0, %s178
      %s181 = sphi 0, %s180
      %s195 = sphi 0, %s181
      %s199 = sphi 0, %s199
      %s201 = sphi 0, %s199
      %s202 = sphi 0, %s201
      %s216 = sphi 0, %s202
      %s220 = sphi 0, %s220
      %s222 = sphi 0, %s220
      %s223 = sphi 0, %s222
      %s237 = sphi 0, %s223
      %s243 = sphi 0, %s245
      %s246 = sphi 0, %s243
      %s247 = sphi 0, %s246
      %s263 = sphi 0, %s247
    $region4: #{model_forward.3} parent=1 // loop_header_branch
      %21 = sbr.rel (%p19) target = $region8
    $region5: #{model_forward.3} parent=1 // loop_body
      %s23 = ssub.s32 %s18, 1
      %s24 = ssub.s32 %s18, 2
      %s31 = sadd.s32 1, %s26
      %p32 = scmp.ge.s32.totalorder %s31, 1
      %s33 = scalar_select %p32, 0, %s31
      %s34 = sadd.s32 1, %s25
      %s35 = scalar_select %p32, %s34, %s25
      %p36 = scmp.ge.s32.totalorder %s35, 2
      %s37 = scalar_select %p36, 0, %s35
      %s38 = ssub.s32 %s25, %s37
      %s39 = ssub.s32 %s26, %s33
      %s40 = sor.u32 %s38, %s39
      %p41 = scmp.eq.s32.totalorder %s40, 0
      %s43 = sadd.s32 %s42, 1
      %s44 = scalar_select %p41, %s42, %s43
      %p47 = pneg %p41
      %p48 = scmp.eq.s32.totalorder %s18, 1
      %p49 = por %p47, %p48
      %p50 = scmp.ne.s32.totalorder %s42, %s45
      %p51 = scmp.eq.s32.totalorder %s18, 0
      %p52 = por %p50, %p51
      %p53 = scmp.ne.s32.totalorder %s42, %s45
      %p54 = scmp.eq.s32.totalorder %s23, 1
      %p55 = por %p53, %p54
      %p56 = scmp.ne.s32.totalorder %s45, %s46
      %p57 = scmp.eq.s32.totalorder %s23, 0
      %p58 = por %p56, %p57
      %p59 = scmp.ne.s32.totalorder %s45, %s46
      %p60 = scmp.eq.s32.totalorder %s24, 1
      %p61 = por %p59, %p60
      %p63 = scmp.ne.s32.totalorder %s46, %s62
      %p64 = scmp.eq.s32.totalorder %s24, 0
      %p65 = por %p63, %p64
      %s66 = ssub.s32 %s25, %s37
      %s67 = ssub.s32 %s26, %s33
      %s68 = sor.u32 %s66, %s67
      %p69 = scmp.eq.s32.totalorder %s68, 0
      %s71 = sadd.s32 %s70, 1
      %s72 = scalar_select %p69, %s70, %s71
      %p75 = pneg %p69
      %p76 = scmp.eq.s32.totalorder %s18, 1
      %p77 = por %p75, %p76
      %p78 = scmp.ne.s32.totalorder %s70, %s73
      %p79 = scmp.eq.s32.totalorder %s18, 0
      %p80 = por %p78, %p79
      %p81 = scmp.ne.s32.totalorder %s70, %s73
      %p82 = scmp.eq.s32.totalorder %s23, 1
      %p83 = por %p81, %p82
      %p84 = scmp.ne.s32.totalorder %s73, %s74
      %p85 = scmp.eq.s32.totalorder %s23, 0
      %p86 = por %p84, %p85
      %p87 = scmp.ne.s32.totalorder %s73, %s74
      %p88 = scmp.eq.s32.totalorder %s24, 1
      %p89 = por %p87, %p88
      %p91 = scmp.ne.s32.totalorder %s74, %s90
      %p92 = scmp.eq.s32.totalorder %s24, 0
      %p93 = por %p91, %p92
      %s95 = sadd.s32 %s94, 1
      %p98 = scmp.eq.s32.totalorder %s18, 1
      %p99 = scmp.ne.s32.totalorder %s94, %s96
      %p100 = scmp.eq.s32.totalorder %s18, 0
      %p101 = por %p99, %p100
      %p102 = scmp.ne.s32.totalorder %s94, %s96
      %p103 = scmp.eq.s32.totalorder %s23, 1
      %p104 = por %p102, %p103
      %p105 = scmp.ne.s32.totalorder %s96, %s97
      %p106 = scmp.eq.s32.totalorder %s23, 0
      %p107 = por %p105, %p106
      %p108 = scmp.ne.s32.totalorder %s96, %s97
      %p109 = scmp.eq.s32.totalorder %s24, 1
      %p110 = por %p108, %p109
      %p112 = scmp.ne.s32.totalorder %s97, %s111
      %p113 = scmp.eq.s32.totalorder %s24, 0
      %p114 = por %p112, %p113
      %s116 = sadd.s32 %s115, 1
      %p119 = scmp.eq.s32.totalorder %s18, 1
      %p120 = scmp.ne.s32.totalorder %s115, %s117
      %p121 = scmp.eq.s32.totalorder %s18, 0
      %p122 = por %p120, %p121
      %p123 = scmp.ne.s32.totalorder %s115, %s117
      %p124 = scmp.eq.s32.totalorder %s23, 1
      %p125 = por %p123, %p124
      %p126 = scmp.ne.s32.totalorder %s117, %s118
      %p127 = scmp.eq.s32.totalorder %s23, 0
      %p128 = por %p126, %p127
      %p129 = scmp.ne.s32.totalorder %s117, %s118
      %p130 = scmp.eq.s32.totalorder %s24, 1
      %p131 = por %p129, %p130
      %p133 = scmp.ne.s32.totalorder %s118, %s132
      %p134 = scmp.eq.s32.totalorder %s24, 0
      %p135 = por %p133, %p134
      %s137 = sadd.s32 %s136, 1
      %p140 = scmp.eq.s32.totalorder %s18, 1
      %p141 = scmp.ne.s32.totalorder %s136, %s138
      %p142 = scmp.eq.s32.totalorder %s18, 0
      %p143 = por %p141, %p142
      %p144 = scmp.ne.s32.totalorder %s136, %s138
      %p145 = scmp.eq.s32.totalorder %s23, 1
      %p146 = por %p144, %p145
      %p147 = scmp.ne.s32.totalorder %s138, %s139
      %p148 = scmp.eq.s32.totalorder %s23, 0
      %p149 = por %p147, %p148
      %p150 = scmp.ne.s32.totalorder %s138, %s139
      %p151 = scmp.eq.s32.totalorder %s24, 1
      %p152 = por %p150, %p151
      %p154 = scmp.ne.s32.totalorder %s139, %s153
      %p155 = scmp.eq.s32.totalorder %s24, 0
      %p156 = por %p154, %p155
      %s158 = sadd.s32 %s157, 1
      %p161 = scmp.eq.s32.totalorder %s18, 1
      %p162 = scmp.ne.s32.totalorder %s157, %s159
      %p163 = scmp.eq.s32.totalorder %s18, 0
      %p164 = por %p162, %p163
      %p165 = scmp.ne.s32.totalorder %s157, %s159
      %p166 = scmp.eq.s32.totalorder %s23, 1
      %p167 = por %p165, %p166
      %p168 = scmp.ne.s32.totalorder %s159, %s160
      %p169 = scmp.eq.s32.totalorder %s23, 0
      %p170 = por %p168, %p169
      %p171 = scmp.ne.s32.totalorder %s159, %s160
      %p172 = scmp.eq.s32.totalorder %s24, 1
      %p173 = por %p171, %p172
      %p175 = scmp.ne.s32.totalorder %s160, %s174
      %p176 = scmp.eq.s32.totalorder %s24, 0
      %p177 = por %p175, %p176
      %s179 = sadd.s32 %s178, 1
      %p182 = scmp.eq.s32.totalorder %s18, 1
      %p183 = scmp.ne.s32.totalorder %s178, %s180
      %p184 = scmp.eq.s32.totalorder %s18, 0
      %p185 = por %p183, %p184
      %p186 = scmp.ne.s32.totalorder %s178, %s180
      %p187 = scmp.eq.s32.totalorder %s23, 1
      %p188 = por %p186, %p187
      %p189 = scmp.ne.s32.totalorder %s180, %s181
      %p190 = scmp.eq.s32.totalorder %s23, 0
      %p191 = por %p189, %p190
      %p192 = scmp.ne.s32.totalorder %s180, %s181
      %p193 = scmp.eq.s32.totalorder %s24, 1
      %p194 = por %p192, %p193
      %p196 = scmp.ne.s32.totalorder %s181, %s195
      %p197 = scmp.eq.s32.totalorder %s24, 0
      %p198 = por %p196, %p197
      %s200 = sadd.s32 %s199, 1
      %p203 = scmp.eq.s32.totalorder %s18, 1
      %p204 = scmp.ne.s32.totalorder %s199, %s201
      %p205 = scmp.eq.s32.totalorder %s18, 0
      %p206 = por %p204, %p205
      %p207 = scmp.ne.s32.totalorder %s199, %s201
      %p208 = scmp.eq.s32.totalorder %s23, 1
      %p209 = por %p207, %p208
      %p210 = scmp.ne.s32.totalorder %s201, %s202
      %p211 = scmp.eq.s32.totalorder %s23, 0
      %p212 = por %p210, %p211
      %p213 = scmp.ne.s32.totalorder %s201, %s202
      %p214 = scmp.eq.s32.totalorder %s24, 1
      %p215 = por %p213, %p214
      %p217 = scmp.ne.s32.totalorder %s202, %s216
      %p218 = scmp.eq.s32.totalorder %s24, 0
      %p219 = por %p217, %p218
      %s221 = sadd.s32 %s220, 1
      %p224 = scmp.eq.s32.totalorder %s18, 1
      %p225 = scmp.ne.s32.totalorder %s220, %s222
      %p226 = scmp.eq.s32.totalorder %s18, 0
      %p227 = por %p225, %p226
      %p228 = scmp.ne.s32.totalorder %s220, %s222
      %p229 = scmp.eq.s32.totalorder %s23, 1
      %p230 = por %p228, %p229
      %p231 = scmp.ne.s32.totalorder %s222, %s223
      %p232 = scmp.eq.s32.totalorder %s23, 0
      %p233 = por %p231, %p232
      %p234 = scmp.ne.s32.totalorder %s222, %s223
      %p235 = scmp.eq.s32.totalorder %s24, 1
      %p236 = por %p234, %p235
      %p238 = scmp.ne.s32.totalorder %s223, %s237
      %p239 = scmp.eq.s32.totalorder %s24, 0
      %p240 = por %p238, %p239
      %s241 = ssub.s32 %s25, %s37
      %p242 = scmp.eq.s32.totalorder %s241, 0
      %s244 = sadd.s32 %s243, 1
      %s245 = scalar_select %p242, %s243, %s244
      %p248 = pneg %p242
      %p249 = scmp.eq.s32.totalorder %s18, 1
      %p250 = por %p248, %p249
      %p251 = scmp.ne.s32.totalorder %s243, %s246
      %p252 = scmp.eq.s32.totalorder %s18, 0
      %p253 = por %p251, %p252
      %p254 = scmp.ne.s32.totalorder %s243, %s246
      %p255 = scmp.eq.s32.totalorder %s23, 1
      %p256 = por %p254, %p255
      %p257 = scmp.ne.s32.totalorder %s246, %s247
      %p258 = scmp.eq.s32.totalorder %s23, 0
      %p259 = por %p257, %p258
      %p260 = scmp.ne.s32.totalorder %s246, %s247
      %p261 = scmp.eq.s32.totalorder %s24, 1
      %p262 = por %p260, %p261
      %p264 = scmp.ne.s32.totalorder %s247, %s263
      %p265 = scmp.eq.s32.totalorder %s24, 0
      %p266 = por %p264, %p265
      %p267 = scmp.le.s32.totalorder 1, %s18
      %p268 = scmp.lt.s32.totalorder %s18, 3
      %p269 = pnand %p267, %p268
      %p270 = pneg %p269
      // Predicated region
      $region9: #{model_forward.3} parent=5 // pred_check
        _
      $region10: #{model_forward.3} parent=5 // pred_check_branch
        %272 = sbr.rel (%p269) target = $region12
      $region11: #{model_forward.3} parent=5 // pred_region
        %s273 = ssub.s32 %s18, 1
        // Predicated region
        $region13: #{model_forward.3} parent=11 // pred_check
          %p274 = pneg %p107
        $region14: #{model_forward.3} parent=11 // pred_check_branch
          %276 = sbr.rel (%p274) target = $region16
        $region15: #{model_forward.3} parent=11 // pred_region
          _
        $region16: #{model_forward.3} parent=11 // pred_fallthru
          _
        // Predicated region
        $region17: #{model_forward.3} parent=11 // pred_check
          %p277 = pneg %p128
        $region18: #{model_forward.3} parent=11 // pred_check_branch
          %279 = sbr.rel (%p277) target = $region20
        $region19: #{model_forward.3} parent=11 // pred_region
          _
        $region20: #{model_forward.3} parent=11 // pred_fallthru
          _
        // Predicated region
        $region21: #{model_forward.3} parent=11 // pred_check
          %p280 = pneg %p149
        $region22: #{model_forward.3} parent=11 // pred_check_branch
          %282 = sbr.rel (%p280) target = $region24
        $region23: #{model_forward.3} parent=11 // pred_region
          _
        $region24: #{model_forward.3} parent=11 // pred_fallthru
          _
        // Predicated region
        $region25: #{model_forward.3} parent=11 // pred_check
          %p283 = pneg %p170
        $region26: #{model_forward.3} parent=11 // pred_check_branch
          %285 = sbr.rel (%p283) target = $region28
        $region27: #{model_forward.3} parent=11 // pred_region
          _
        $region28: #{model_forward.3} parent=11 // pred_fallthru
          _
        // Predicated region
        $region29: #{model_forward.3} parent=11 // pred_check
          %p286 = pneg %p191
        $region30: #{model_forward.3} parent=11 // pred_check_branch
          %288 = sbr.rel (%p286) target = $region32
        $region31: #{model_forward.3} parent=11 // pred_region
          _
        $region32: #{model_forward.3} parent=11 // pred_fallthru
          _
        // Predicated region
        $region33: #{model_forward.3} parent=11 // pred_check
          %p289 = pneg %p212
        $region34: #{model_forward.3} parent=11 // pred_check_branch
          %291 = sbr.rel (%p289) target = $region36
        $region35: #{model_forward.3} parent=11 // pred_region
          _
        $region36: #{model_forward.3} parent=11 // pred_fallthru
          _
        // Predicated region
        $region37: #{model_forward.3} parent=11 // pred_check
          %p292 = pneg %p233
        $region38: #{model_forward.3} parent=11 // pred_check_branch
          %294 = sbr.rel (%p292) target = $region40
        $region39: #{model_forward.3} parent=11 // pred_region
          _
        $region40: #{model_forward.3} parent=11 // pred_fallthru
          _
      $region12: #{model_forward.3} parent=5 // pred_fallthru
        _
      %p295 = scmp.lt.s32.totalorder %s18, 2
      // Predicated region
      $region41: #{model_forward.3} parent=5 // pred_check
        %p296 = pneg %p295
      $region42: #{model_forward.3} parent=5 // pred_check_branch
        %298 = sbr.rel (%p296) target = $region44
      $region43: #{model_forward.3} parent=5 // pred_region
        // Predicated region
        $region45: #{model_forward.3} parent=43 // pred_check
          %p299 = pneg %p52
        $region46: #{model_forward.3} parent=43 // pred_check_branch
          %301 = sbr.rel (%p299) target = $region48
        $region47: #{model_forward.3} parent=43 // pred_region
          %s302 = smul.u32 2, %s26
          %p303 = scmp.lt.s32.totalorder %s25, 1
          %s304 = scalar_select %p303, %s25, 1
          %p305 = scmp.lt.s32.totalorder %s302, 1
          %s306 = scalar_select %p305, %s302, 1
          %s307 = smul.addr %s304, 2
          %s308 = sadd.s32 %s306, %s307
          %s309 = smul.addr %s308, 8
          %s310 = scalar_lea.vmem %s0, %s309
          %s311 = smul.u32 2, %s26
        $region48: #{model_forward.3} parent=43 // pred_fallthru
          _
        // Predicated region
        $region49: #{model_forward.3} parent=43 // pred_check
          %p312 = pneg %p80
        $region50: #{model_forward.3} parent=43 // pred_check_branch
          %314 = sbr.rel (%p312) target = $region52
        $region51: #{model_forward.3} parent=43 // pred_region
          %s315 = smul.u32 2, %s26
          %p316 = scmp.lt.s32.totalorder %s25, 1
          %s317 = scalar_select %p316, %s25, 1
          %p318 = scmp.lt.s32.totalorder %s315, 1
          %s319 = scalar_select %p318, %s315, 1
          %s320 = smul.addr %s317, 2
          %s321 = sadd.s32 %s319, %s320
          %s322 = smul.addr %s321, 8
          %s323 = scalar_lea.vmem %s1, %s322
          %s324 = smul.u32 2, %s26
        $region52: #{model_forward.3} parent=43 // pred_fallthru
          _
      $region44: #{model_forward.3} parent=5 // pred_fallthru
        _
      %p325 = scmp.le.s32.totalorder 1, %s18
      %p326 = scmp.lt.s32.totalorder %s18, 3
      %p327 = pnand %p325, %p326
      %p328 = pneg %p327
      // Predicated region
      $region53: #{model_forward.3} parent=5 // pred_check
        _
      $region54: #{model_forward.3} parent=5 // pred_check_branch
        %330 = sbr.rel (%p327) target = $region56
      $region55: #{model_forward.3} parent=5 // pred_region
        %s331 = ssub.s32 %s18, 1
        %s332 = smul.u32 2, %s28
        %p333 = scmp.lt.s32.totalorder %s27, 1
        %s334 = scalar_select %p333, %s27, 1
        %p335 = scmp.lt.s32.totalorder %s332, 1
        %s336 = scalar_select %p335, %s332, 1
        %s337 = smul.addr %s334, 2
        %s338 = sadd.s32 %s336, %s337
        %s339 = smul.addr %s338, 8
        %s340 = scalar_lea.vmem %s0, %s339
        %p341 = pneg %p58
        %p342 = pneg %p55
        %s343 = smul.u32 2, %s28
        %p344 = scmp.lt.s32.totalorder %s27, 1
        %s345 = scalar_select %p344, %s27, 1
        %p346 = scmp.lt.s32.totalorder %s343, 1
        %s347 = scalar_select %p346, %s343, 1
        %s348 = smul.addr %s345, 2
        %s349 = sadd.s32 %s347, %s348
        %s350 = smul.addr %s349, 8
        %s351 = scalar_lea.vmem %s1, %s350
        %p352 = pneg %p86
        %p353 = pneg %p83
        %p354 = pneg %p107
        %p355 = pneg %p104
        %p356 = pneg %p128
        %p357 = pneg %p125
        %p358 = pneg %p149
        %p359 = pneg %p146
        %p360 = pneg %p170
        %p361 = pneg %p167
        %p362 = pneg %p191
        %p363 = pneg %p188
        %p364 = pneg %p212
        %p365 = pneg %p209
        %p366 = pneg %p233
        %p367 = pneg %p230
        %p368 = pneg %p259
        %p369 = pneg %p256
        %s370 = sand.u32 %s246, 1
        %s371 = scalar_lea.sflag [#allocation4], %s370
        %s372 = sand.u32 %s246, 1
        %s373 = scalar_lea.vmem [#allocation3], %s372
        %s374 = smul.u32 2, %s28
        %p375 = scmp.lt.s32.totalorder %s27, 1
        %s376 = scalar_select %p375, %s27, 1
        %p377 = scmp.lt.s32.totalorder %s374, 1
        %s378 = scalar_select %p377, %s374, 1
        %s379 = smul.addr %s376, 2
        %s380 = sadd.s32 %s378, %s379
        %s381 = smul.addr %s380, 8
        %s382 = scalar_lea.vmem %s0, %s381
        %s383 = smul.u32 2, %s28
        %s384 = smul.u32 2, %s28
        %p385 = scmp.lt.s32.totalorder %s27, 1
        %s386 = scalar_select %p385, %s27, 1
        %p387 = scmp.lt.s32.totalorder %s384, 1
        %s388 = scalar_select %p387, %s384, 1
        %s389 = smul.addr %s386, 2
        %s390 = sadd.s32 %s388, %s389
        %s391 = smul.addr %s390, 8
        %s392 = scalar_lea.vmem %s1, %s391
        %s393 = smul.u32 2, %s28
        %v395 = vld [vmem:[%s382] sm:$0xff]
        %v396 = vld [vmem:[%s382 + $0x8] sm:$0xff]
        %v397 = vpack.c.bf16 %v396, %v395
        %v398 = vld [vmem:[%s2] sm:$0xf]
        %v399 = vld [vmem:[%s2 + $0x4] sm:$0xf]
        %v400 = vld [vmem:[%s2 + $0x8] sm:$0xf]
        %v401 = vld [vmem:[%s2 + $0xc] sm:$0xf]
        %v402 = vld [vmem:[%s392] sm:$0xff]
        %v403 = vld [vmem:[%s392 + $0x8] sm:$0xff]
        %v404 = vpack.c.bf16 %v403, %v402
        %v405 = vld [vmem:[%s3] sm:$0x3]
        %vm406 = vcmask 23552
        %v408 = vsel %vm406, %v404, 0
        %vm410 = vcmask 1040384
        %vm411 = vcmask 1041408
        %v412 = vsel %vm410, 4294967295, 65535
        %v413 = vsel %vm411, %v412, 0
        %v415 = vand.u32 %v405, %v413
        %417 = vmatprep.subr.bf16.mxu0 0
        %418 = vmatpush1.bf16.msra.mxu0 0
        %419 = vmatprep.subr.bf16.mxu0 0
        %420 = vmatpush1.bf16.msra.mxu0 0
        %421 = vmatprep.subr.bf16.mxu0 0
        %422 = vmatpush1.bf16.msra.mxu0 0
        %423 = vmatprep.subr.bf16.mxu0 0
        %424 = vmatpush1.bf16.msra.mxu0 0
        %425 = vmatprep.subr.bf16.mxu0 0
        %426 = vmatpush1.bf16.msra.mxu0 0
        %427 = vmatprep.subr.bf16.mxu0 0
        %428 = vmatpush1.bf16.msra.mxu0 0
        %429 = vmatprep.subr.bf16.mxu0 0
        %430 = vmatpush1.bf16.msra.mxu0 0
        %431 = vmatprep.subr.bf16.mxu0 0
        %432 = vmatpush1.bf16.msra.mxu0 %v415
        %433 = vmatprep.subr.bf16.mxu0 0
        %434 = vmatpush2.bf16.msra.mxu0 0
        %435 = vmatprep.subr.bf16.mxu0 0
        %436 = vmatpush2.bf16.msra.mxu0 0
        %437 = vmatprep.subr.bf16.mxu0 0
        %438 = vmatpush2.bf16.msra.mxu0 0
        %439 = vmatprep.subr.bf16.mxu0 0
        %440 = vmatpush2.bf16.msra.mxu0 0
        %441 = vmatprep.subr.bf16.mxu0 0
        %442 = vmatpush2.bf16.msra.mxu0 0
        %443 = vmatprep.subr.bf16.mxu0 0
        %444 = vmatpush2.bf16.msra.mxu0 0
        %445 = vmatprep.subr.bf16.mxu0 0
        %446 = vmatpush2.bf16.msra.mxu0 0
        %447 = vmatprep.subr.bf16.mxu0 0
        %448 = vmatpush2.bf16.msra.mxu0 0
        %449 = vmatprep.mubr.bf16.mxu0 0
        %450 = vmatmul.mubr.bf16.gmra.mxu0 %v408
        %v451 = vpop.f32.mrf.mxu0
        %v452 = vadd.f32 0.0, %v451
        %v453 = vpop.f32.mrf.mxu0
        %v454 = vpop.f32.mrf.mxu0
        %v455 = vadd.f32 0.0, %v454
        %v456 = vpop.f32.mrf.mxu0
        %457 = vdwg.mxu0
        %v462 = vunpack.c.l.b16 %v398
        %v463 = vunpack.c.l.b16 %v399
        %v464 = vunpack.c.l.b16 %v400
        %v465 = vunpack.c.l.b16 %v401
        %v466 = vpack.c.b16 %v463, %v462
        %v467 = vpack.c.b16 %v465, %v464
        %vm470 = vcmask 261120
        %v472 = vsel %vm470, %v397, 0
        %474 = vmatprep.subr.bf16.mxu0 0
        %475 = vmatpush1.bf16.msra.mxu0 0
        %476 = vmatprep.subr.bf16.mxu0 0
        %477 = vmatpush1.bf16.msra.mxu0 0
        %478 = vmatprep.subr.bf16.mxu0 0
        %479 = vmatpush1.bf16.msra.mxu0 0
        %480 = vmatprep.subr.bf16.mxu0 0
        %481 = vmatpush1.bf16.msra.mxu0 0
        %482 = vmatprep.subr.bf16.mxu0 0
        %483 = vmatpush1.bf16.msra.mxu0 0
        %484 = vmatprep.subr.bf16.mxu0 0
        %485 = vmatpush1.bf16.msra.mxu0 0
        %486 = vmatprep.subr.bf16.mxu0 0
        %487 = vmatpush1.bf16.msra.mxu0 %v467
        %488 = vmatprep.subr.bf16.mxu0 0
        %489 = vmatpush1.bf16.msra.mxu0 %v466
        %490 = vmatprep.subr.bf16.mxu0 0
        %491 = vmatpush2.bf16.msra.mxu0 0
        %492 = vmatprep.subr.bf16.mxu0 0
        %493 = vmatpush2.bf16.msra.mxu0 0
        %494 = vmatprep.subr.bf16.mxu0 0
        %495 = vmatpush2.bf16.msra.mxu0 0
        %496 = vmatprep.subr.bf16.mxu0 0
        %497 = vmatpush2.bf16.msra.mxu0 0
        %498 = vmatprep.subr.bf16.mxu0 0
        %499 = vmatpush2.bf16.msra.mxu0 0
        %500 = vmatprep.subr.bf16.mxu0 0
        %501 = vmatpush2.bf16.msra.mxu0 0
        %502 = vmatprep.subr.bf16.mxu0 0
        %503 = vmatpush2.bf16.msra.mxu0 0
        %504 = vmatprep.subr.bf16.mxu0 0
        %505 = vmatpush2.bf16.msra.mxu0 0
        %506 = vmatprep.mubr.bf16.mxu0 0
        %507 = vmatmul.mubr.bf16.gmra.mxu0 %v472
        %v508 = vpop.f32.mrf.mxu0
        %v509 = vadd.f32 %v452, %v508
        %v510 = vpop.f32.mrf.mxu0
        %v511 = vpop.f32.mrf.mxu0
        %v512 = vadd.f32 %v455, %v511
        %v513 = vpop.f32.mrf.mxu0
        %514 = vdwg.mxu0
        %v515 = vld [vmem:[%s4] sm:$0x1]
        %v517 = vlaneseq
        %v518 = vshrl.u32 %v517, 7
        %v519 = vsub.s32 0, %v518
        %v520 = vrot.slane %v515, %v519
        %v522 = vadd.f32 %v509, %v520
        %v523 = vadd.f32 %v512, %v520
        %v524 = vmax.f32 %v522, 0.0
        %v525 = vmax.f32 %v523, 0.0
        %vm526 = vcmask 523264
        %v527 = vsel %vm526, %v524, -inf
        %v528 = vsel %vm526, %v525, -inf
        %v529 = vmax.f32 %v527, %v528
        %v530 = vrot.slane %v529, 4
        %v531 = vmax.f32 %v529, %v530
        %v532 = vrot.slane %v531, 2
        %v533 = vmax.f32 %v531, %v532
        %v534 = vrot.slane %v533, 1
        %v535 = vmax.f32 %v533, %v534
        %p536 = scmp.eq.s32.totalorder %s28, 0
        // Predicated region
        $region57: #{model_forward.3} parent=55 // pred_check
          %p537 = pneg %p536
        $region58: #{model_forward.3} parent=55 // pred_check_branch
          %539 = sbr.rel (%p537) target = $region60
        $region59: #{model_forward.3} parent=55 // pred_region
          %vm540 = vcmask 516096
          %541 = vst.msk [vmem:[#allocation2] sm:$0x1] %vm540, %v535
        $region60: #{model_forward.3} parent=55 // pred_fallthru
          _
        %p542 = scmp.gt.s32.totalorder %s28, 0
        // Predicated region
        $region61: #{model_forward.3} parent=55 // pred_check
          %p543 = pneg %p542
        $region62: #{model_forward.3} parent=55 // pred_check_branch
          %545 = sbr.rel (%p543) target = $region64
        $region63: #{model_forward.3} parent=55 // pred_region
          %v546 = vld [vmem:[#allocation2] sm:$0x1]
          %v547 = vmax.f32 %v546, %v535
          %vm548 = vcmask 516096
          %549 = vst.msk [vmem:[#allocation2] sm:$0x1] %vm548, %v547
        $region64: #{model_forward.3} parent=55 // pred_fallthru
          _
        // Predicated region
        $region65: #{model_forward.3} parent=55 // pred_check
          %p550 = pneg %p536
        $region66: #{model_forward.3} parent=55 // pred_check_branch
          %552 = sbr.rel (%p550) target = $region68
        $region67: #{model_forward.3} parent=55 // pred_region
          %v553 = vld [vmem:[#allocation2] sm:$0x1]
          %v554 = vpack.c.bf16 %v553, %v553
          %v555 = vld [vmem:[%s5] sm:$0xf]
          %v556 = vld [vmem:[%s5 + $0x4] sm:$0xf]
          %v557 = vld [vmem:[%s5 + $0x8] sm:$0xf]
          %v558 = vld [vmem:[%s5 + $0xc] sm:$0xf]
          %v559 = vld [vmem:[%s5 + $0x10] sm:$0xf]
          %v560 = vld [vmem:[%s5 + $0x14] sm:$0xf]
          %v561 = vld [vmem:[%s5 + $0x18] sm:$0xf]
          %v562 = vld [vmem:[%s5 + $0x1c] sm:$0xf]
          %v563 = vld [vmem:[%s7] sm:$0x1]
          %v572 = vunpack.c.l.b16 %v555
          %v573 = vunpack.c.l.b16 %v556
          %v574 = vunpack.c.l.b16 %v557
          %v575 = vunpack.c.l.b16 %v558
          %v576 = vunpack.c.l.b16 %v559
          %v577 = vunpack.c.l.b16 %v560
          %v578 = vunpack.c.l.b16 %v561
          %v579 = vunpack.c.l.b16 %v562
          %v580 = vpack.c.b16 %v573, %v572
          %v581 = vpack.c.b16 %v575, %v574
          %v582 = vpack.c.b16 %v577, %v576
          %v583 = vpack.c.b16 %v579, %v578
          %v589 = vsel %vm526, %v554, 0
          %591 = vmatprep.subr.bf16.mxu0 0
          %592 = vmatpush1.bf16.msra.mxu0 0
          %593 = vmatprep.subr.bf16.mxu0 0
          %594 = vmatpush1.bf16.msra.mxu0 0
          %595 = vmatprep.subr.bf16.mxu0 0
          %596 = vmatpush1.bf16.msra.mxu0 0
          %597 = vmatprep.subr.bf16.mxu0 0
          %598 = vmatpush1.bf16.msra.mxu0 0
          %599 = vmatprep.subr.bf16.mxu0 0
          %600 = vmatpush1.bf16.msra.mxu0 %v583
          %601 = vmatprep.subr.bf16.mxu0 0
          %602 = vmatpush1.bf16.msra.mxu0 %v582
          %603 = vmatprep.subr.bf16.mxu0 0
          %604 = vmatpush1.bf16.msra.mxu0 %v581
          %605 = vmatprep.subr.bf16.mxu0 0
          %606 = vmatpush1.bf16.msra.mxu0 %v580
          %607 = vmatprep.subr.bf16.mxu0 0
          %608 = vmatpush2.bf16.msra.mxu0 0
          %609 = vmatprep.subr.bf16.mxu0 0
          %610 = vmatpush2.bf16.msra.mxu0 0
          %611 = vmatprep.subr.bf16.mxu0 0
          %612 = vmatpush2.bf16.msra.mxu0 0
          %613 = vmatprep.subr.bf16.mxu0 0
          %614 = vmatpush2.bf16.msra.mxu0 0
          %615 = vmatprep.subr.bf16.mxu0 0
          %616 = vmatpush2.bf16.msra.mxu0 0
          %617 = vmatprep.subr.bf16.mxu0 0
          %618 = vmatpush2.bf16.msra.mxu0 0
          %619 = vmatprep.subr.bf16.mxu0 0
          %620 = vmatpush2.bf16.msra.mxu0 0
          %621 = vmatprep.subr.bf16.mxu0 0
          %622 = vmatpush2.bf16.msra.mxu0 0
          %623 = vmatprep.mubr.bf16.mxu0 0
          %624 = vmatmul.mubr.bf16.gmra.mxu0 %v589
          %v625 = vpop.f32.mrf.mxu0
          %v626 = vadd.f32 %v563, %v625
          %v627 = vpop.f32.mrf.mxu0
          %v628 = vpop.f32.mrf.mxu0
          %v629 = vpop.f32.mrf.mxu0
          %630 = vdwg.mxu0
          %v631 = vmax.f32 %v626, 0.0
          %v632 = vpack.c.bf16 %v631, %v631
          %v633 = vld [vmem:[%s6] sm:$0xf]
          %v634 = vld [vmem:[%s6 + $0x4] sm:$0xf]
          %v635 = vld [vmem:[%s6 + $0x8] sm:$0xf]
          %v636 = vld [vmem:[%s6 + $0xc] sm:$0xf]
          %v637 = vld [vmem:[%s8] sm:$0x1]
          %v642 = vunpack.c.l.b16 %v633
          %v643 = vunpack.c.l.b16 %v634
          %v644 = vunpack.c.l.b16 %v635
          %v645 = vunpack.c.l.b16 %v636
          %v646 = vpack.c.b16 %v643, %v642
          %v647 = vpack.c.b16 %v645, %v644
          %v651 = vsel %vm470, %v632, 0
          %653 = vmatprep.subr.bf16.mxu0 0
          %654 = vmatpush1.bf16.msra.mxu0 0
          %655 = vmatprep.subr.bf16.mxu0 0
          %656 = vmatpush1.bf16.msra.mxu0 0
          %657 = vmatprep.subr.bf16.mxu0 0
          %658 = vmatpush1.bf16.msra.mxu0 0
          %659 = vmatprep.subr.bf16.mxu0 0
          %660 = vmatpush1.bf16.msra.mxu0 0
          %661 = vmatprep.subr.bf16.mxu0 0
          %662 = vmatpush1.bf16.msra.mxu0 0
          %663 = vmatprep.subr.bf16.mxu0 0
          %664 = vmatpush1.bf16.msra.mxu0 0
          %665 = vmatprep.subr.bf16.mxu0 0
          %666 = vmatpush1.bf16.msra.mxu0 %v647
          %667 = vmatprep.subr.bf16.mxu0 0
          %668 = vmatpush1.bf16.msra.mxu0 %v646
          %669 = vmatprep.subr.bf16.mxu0 0
          %670 = vmatpush2.bf16.msra.mxu0 0
          %671 = vmatprep.subr.bf16.mxu0 0
          %672 = vmatpush2.bf16.msra.mxu0 0
          %673 = vmatprep.subr.bf16.mxu0 0
          %674 = vmatpush2.bf16.msra.mxu0 0
          %675 = vmatprep.subr.bf16.mxu0 0
          %676 = vmatpush2.bf16.msra.mxu0 0
          %677 = vmatprep.subr.bf16.mxu0 0
          %678 = vmatpush2.bf16.msra.mxu0 0
          %679 = vmatprep.subr.bf16.mxu0 0
          %680 = vmatpush2.bf16.msra.mxu0 0
          %681 = vmatprep.subr.bf16.mxu0 0
          %682 = vmatpush2.bf16.msra.mxu0 0
          %683 = vmatprep.subr.bf16.mxu0 0
          %684 = vmatpush2.bf16.msra.mxu0 0
          %685 = vmatprep.mubr.bf16.mxu0 0
          %686 = vmatmul.mubr.bf16.gmra.mxu0 %v651
          %v687 = vpop.f32.mrf.mxu0
          %v688 = vadd.f32 %v637, %v687
          %v689 = vpop.f32.mrf.mxu0
          %v690 = vpop.f32.mrf.mxu0
          %v691 = vpop.f32.mrf.mxu0
          %692 = vdwg.mxu0
          %vm693 = vcmask 57344
          %694 = vst.msk [vmem:[%s373] sm:$0x1] %vm693, %v688
        $region68: #{model_forward.3} parent=55 // pred_fallthru
          _
        %s695 = sand.u32 %s246, 1
        %s696 = scalar_lea.sflag [#allocation4], %s695
        %s697 = sand.u32 %s246, 1
        %s698 = scalar_lea.vmem [#allocation3], %s697
        // Predicated region
        $region69: #{model_forward.3} parent=55 // pred_check
          %p699 = pneg %p256
        $region70: #{model_forward.3} parent=55 // pred_check_branch
          %701 = sbr.rel (%p699) target = $region72
        $region71: #{model_forward.3} parent=55 // pred_region
          %s703 = ssub.s32 16, 16
          %704 = vsyncadd %s696, %s703
          %s705 = smul.addr %s27, 16
          %s706 = scalar_lea.hbm %s9, %s705
          %s708 = sshll.u32 %s698, 4
          %s709 = int_to_ptr.vmem [resolvable:$true] %s708
          %711 = dma.vmem_to_hbm [thread:$0]  %s709, 16, %s706, %s696
        $region72: #{model_forward.3} parent=55 // pred_fallthru
          _
      $region56: #{model_forward.3} parent=5 // pred_fallthru
        _
      %p712 = scmp.le.s32.totalorder 2, %s18
      // Predicated region
      $region73: #{model_forward.3} parent=5 // pred_check
        %p713 = pneg %p712
      $region74: #{model_forward.3} parent=5 // pred_check_branch
        %715 = sbr.rel (%p713) target = $region76
      $region75: #{model_forward.3} parent=5 // pred_region
        %s716 = ssub.s32 %s18, 2
        // Predicated region
        $region77: #{model_forward.3} parent=75 // pred_check
          %p717 = pneg %p262
        $region78: #{model_forward.3} parent=75 // pred_check_branch
          %719 = sbr.rel (%p717) target = $region80
        $region79: #{model_forward.3} parent=75 // pred_region
          %s720 = sand.u32 %s247, 1
          %s721 = scalar_lea.sflag [#allocation4], %s720
          %s722 = sand.u32 %s247, 1
          %s723 = scalar_lea.vmem [#allocation3], %s722
          %724 = dma.done %s721, 16
        $region80: #{model_forward.3} parent=75 // pred_fallthru
          _
      $region76: #{model_forward.3} parent=5 // pred_fallthru
        _
    $region6: #{model_forward.3} parent=1 // loop_footer
      %s22 = sadd.s32 1, %s18
    $region7: #{model_forward.3} parent=1 // loop_footer_branch
      %17 = sbr.rel target = $region3
    $region8: #{model_forward.3} parent=1 // loop_exit
      _
    %725 = vsyncpa [#allocation4], 1
    %s726 = scalar_lea.sflag [#allocation4], 1
    %727 = vsyncpa %s726, 1

// kernel: model_forward.2
$region0: #{model_forward.2}
  #allocation0 [shape = 'u32[]', space=smem, size = 0x4, offset = 0x4, fixed_abs, tag = 'smem constant byte address 0x4 - core index']
  #allocation1 [shape = 'u32[144,128]{1,0:T(1,128)}', space=vmem, size = 0x12000, scoped, tag = 'internal scratch']
  %s0 = inlined_call_operand.vmem [shape: f32[2,3,16], index: 0, kind: input, shape index: {}]
  %s1 = inlined_call_operand.vmem [shape: f32[2,16,3], index: 1, kind: input, shape index: {}]
  %s2 = inlined_call_operand.vmem [shape: f32[2,16,4], index: 2, kind: input, shape index: {}, may-alias: {2,3}]
  %s3 = inlined_call_operand.vmem [shape: f32[2,16,4], index: 3, kind: input, shape index: {}, may-alias: {2,3}]
  %s4 = inlined_call_operand.vmem [shape: bf16[4,32], index: 4, kind: input, shape index: {}]
  %s5 = inlined_call_operand.vmem [shape: bf16[4,32], index: 5, kind: input, shape index: {}]
  %s6 = inlined_call_operand.vmem [shape: bf16[32,32], index: 6, kind: input, shape index: {}]
  %s7 = inlined_call_operand.vmem [shape: f32[1,32], index: 7, kind: input, shape index: {}]
  %s8 = inlined_call_operand.vmem [shape: f32[1,32], index: 8, kind: input, shape index: {}]
  %s9 = inlined_call_operand.vmem [shape: f32[2,16,32], index: 9, kind: output, shape index: {}]
  %s10 = sld [smem:[#allocation0]]
  $region69: #{model_forward.2} parent=0
    _
  %s12 = ssub.s32 1, %s10
  %s13 = scalar_select 0, %s12, %s10
  loop: start=0, step=1, limit=4
  $region2: #{model_forward.2} parent=0 // loop_pre_header
    _
  $region3: #{model_forward.2} parent=0 // loop_header
    %s15 = sphi 0, %s19
    %p16 = scmp.ge.s32.totalorder %s15, 4
    %s22 = sphi 0, %s34
    %s23 = sphi 0, %s30
    %s24 = sphi 0, %s22
    %s25 = sphi 0, %s23
    %s26 = sphi 0, %s24
    %s27 = sphi 0, %s25
    %s37 = sphi 0, %s39
    %s40 = sphi 0, %s37
    %s41 = sphi 0, %s40
    %s57 = sphi 0, %s41
    %s65 = sphi 0, %s67
    %s68 = sphi 0, %s65
    %s69 = sphi 0, %s68
    %s85 = sphi 0, %s69
    %s91 = sphi 0, %s93
    %s94 = sphi 0, %s91
    %s95 = sphi 0, %s94
    %s111 = sphi 0, %s95
    %s119 = sphi 0, %s121
    %s122 = sphi 0, %s119
    %s123 = sphi 0, %s122
    %s139 = sphi 0, %s123
    %s143 = sphi 0, %s143
    %s145 = sphi 0, %s143
    %s146 = sphi 0, %s145
    %s160 = sphi 0, %s146
    %s164 = sphi 0, %s164
    %s166 = sphi 0, %s164
    %s167 = sphi 0, %s166
    %s181 = sphi 0, %s167
    %s185 = sphi 0, %s185
    %s187 = sphi 0, %s185
    %s188 = sphi 0, %s187
    %s202 = sphi 0, %s188
    %s206 = sphi 0, %s206
    %s208 = sphi 0, %s206
    %s209 = sphi 0, %s208
    %s223 = sphi 0, %s209
    %s227 = sphi 0, %s227
    %s229 = sphi 0, %s227
    %s230 = sphi 0, %s229
    %s244 = sphi 0, %s230
    %s252 = sphi 0, %s254
    %s255 = sphi 0, %s252
    %s256 = sphi 0, %s255
    %s272 = sphi 0, %s256
  $region4: #{model_forward.2} parent=0 // loop_header_branch
    %18 = sbr.rel (%p16) target = $region8
  $region5: #{model_forward.2} parent=0 // loop_body
    %s20 = ssub.s32 %s15, 1
    %s21 = ssub.s32 %s15, 2
    %s28 = sadd.s32 1, %s23
    %p29 = scmp.ge.s32.totalorder %s28, 1
    %s30 = scalar_select %p29, 0, %s28
    %s31 = sadd.s32 1, %s22
    %s32 = scalar_select %p29, %s31, %s22
    %p33 = scmp.ge.s32.totalorder %s32, 2
    %s34 = scalar_select %p33, 0, %s32
    %s35 = ssub.s32 %s22, %s34
    %p36 = scmp.eq.s32.totalorder %s35, 0
    %s38 = sadd.s32 %s37, 1
    %s39 = scalar_select %p36, %s37, %s38
    %p42 = pneg %p36
    %p43 = scmp.eq.s32.totalorder %s15, 1
    %p44 = por %p42, %p43
    %p45 = scmp.ne.s32.totalorder %s37, %s40
    %p46 = scmp.eq.s32.totalorder %s15, 0
    %p47 = por %p45, %p46
    %p48 = scmp.ne.s32.totalorder %s37, %s40
    %p49 = scmp.eq.s32.totalorder %s20, 1
    %p50 = por %p48, %p49
    %p51 = scmp.ne.s32.totalorder %s40, %s41
    %p52 = scmp.eq.s32.totalorder %s20, 0
    %p53 = por %p51, %p52
    %p54 = scmp.ne.s32.totalorder %s40, %s41
    %p55 = scmp.eq.s32.totalorder %s21, 1
    %p56 = por %p54, %p55
    %p58 = scmp.ne.s32.totalorder %s41, %s57
    %p59 = scmp.eq.s32.totalorder %s21, 0
    %p60 = por %p58, %p59
    %s61 = ssub.s32 %s22, %s34
    %s62 = ssub.s32 %s23, %s30
    %s63 = sor.u32 %s61, %s62
    %p64 = scmp.eq.s32.totalorder %s63, 0
    %s66 = sadd.s32 %s65, 1
    %s67 = scalar_select %p64, %s65, %s66
    %p70 = pneg %p64
    %p71 = scmp.eq.s32.totalorder %s15, 1
    %p72 = por %p70, %p71
    %p73 = scmp.ne.s32.totalorder %s65, %s68
    %p74 = scmp.eq.s32.totalorder %s15, 0
    %p75 = por %p73, %p74
    %p76 = scmp.ne.s32.totalorder %s65, %s68
    %p77 = scmp.eq.s32.totalorder %s20, 1
    %p78 = por %p76, %p77
    %p79 = scmp.ne.s32.totalorder %s68, %s69
    %p80 = scmp.eq.s32.totalorder %s20, 0
    %p81 = por %p79, %p80
    %p82 = scmp.ne.s32.totalorder %s68, %s69
    %p83 = scmp.eq.s32.totalorder %s21, 1
    %p84 = por %p82, %p83
    %p86 = scmp.ne.s32.totalorder %s69, %s85
    %p87 = scmp.eq.s32.totalorder %s21, 0
    %p88 = por %p86, %p87
    %s89 = ssub.s32 %s22, %s34
    %p90 = scmp.eq.s32.totalorder %s89, 0
    %s92 = sadd.s32 %s91, 1
    %s93 = scalar_select %p90, %s91, %s92
    %p96 = pneg %p90
    %p97 = scmp.eq.s32.totalorder %s15, 1
    %p98 = por %p96, %p97
    %p99 = scmp.ne.s32.totalorder %s91, %s94
    %p100 = scmp.eq.s32.totalorder %s15, 0
    %p101 = por %p99, %p100
    %p102 = scmp.ne.s32.totalorder %s91, %s94
    %p103 = scmp.eq.s32.totalorder %s20, 1
    %p104 = por %p102, %p103
    %p105 = scmp.ne.s32.totalorder %s94, %s95
    %p106 = scmp.eq.s32.totalorder %s20, 0
    %p107 = por %p105, %p106
    %p108 = scmp.ne.s32.totalorder %s94, %s95
    %p109 = scmp.eq.s32.totalorder %s21, 1
    %p110 = por %p108, %p109
    %p112 = scmp.ne.s32.totalorder %s95, %s111
    %p113 = scmp.eq.s32.totalorder %s21, 0
    %p114 = por %p112, %p113
    %s115 = ssub.s32 %s22, %s34
    %s116 = ssub.s32 %s23, %s30
    %s117 = sor.u32 %s115, %s116
    %p118 = scmp.eq.s32.totalorder %s117, 0
    %s120 = sadd.s32 %s119, 1
    %s121 = scalar_select %p118, %s119, %s120
    %p124 = pneg %p118
    %p125 = scmp.eq.s32.totalorder %s15, 1
    %p126 = por %p124, %p125
    %p127 = scmp.ne.s32.totalorder %s119, %s122
    %p128 = scmp.eq.s32.totalorder %s15, 0
    %p129 = por %p127, %p128
    %p130 = scmp.ne.s32.totalorder %s119, %s122
    %p131 = scmp.eq.s32.totalorder %s20, 1
    %p132 = por %p130, %p131
    %p133 = scmp.ne.s32.totalorder %s122, %s123
    %p134 = scmp.eq.s32.totalorder %s20, 0
    %p135 = por %p133, %p134
    %p136 = scmp.ne.s32.totalorder %s122, %s123
    %p137 = scmp.eq.s32.totalorder %s21, 1
    %p138 = por %p136, %p137
    %p140 = scmp.ne.s32.totalorder %s123, %s139
    %p141 = scmp.eq.s32.totalorder %s21, 0
    %p142 = por %p140, %p141
    %s144 = sadd.s32 %s143, 1
    %p147 = scmp.eq.s32.totalorder %s15, 1
    %p148 = scmp.ne.s32.totalorder %s143, %s145
    %p149 = scmp.eq.s32.totalorder %s15, 0
    %p150 = por %p148, %p149
    %p151 = scmp.ne.s32.totalorder %s143, %s145
    %p152 = scmp.eq.s32.totalorder %s20, 1
    %p153 = por %p151, %p152
    %p154 = scmp.ne.s32.totalorder %s145, %s146
    %p155 = scmp.eq.s32.totalorder %s20, 0
    %p156 = por %p154, %p155
    %p157 = scmp.ne.s32.totalorder %s145, %s146
    %p158 = scmp.eq.s32.totalorder %s21, 1
    %p159 = por %p157, %p158
    %p161 = scmp.ne.s32.totalorder %s146, %s160
    %p162 = scmp.eq.s32.totalorder %s21, 0
    %p163 = por %p161, %p162
    %s165 = sadd.s32 %s164, 1
    %p168 = scmp.eq.s32.totalorder %s15, 1
    %p169 = scmp.ne.s32.totalorder %s164, %s166
    %p170 = scmp.eq.s32.totalorder %s15, 0
    %p171 = por %p169, %p170
    %p172 = scmp.ne.s32.totalorder %s164, %s166
    %p173 = scmp.eq.s32.totalorder %s20, 1
    %p174 = por %p172, %p173
    %p175 = scmp.ne.s32.totalorder %s166, %s167
    %p176 = scmp.eq.s32.totalorder %s20, 0
    %p177 = por %p175, %p176
    %p178 = scmp.ne.s32.totalorder %s166, %s167
    %p179 = scmp.eq.s32.totalorder %s21, 1
    %p180 = por %p178, %p179
    %p182 = scmp.ne.s32.totalorder %s167, %s181
    %p183 = scmp.eq.s32.totalorder %s21, 0
    %p184 = por %p182, %p183
    %s186 = sadd.s32 %s185, 1
    %p189 = scmp.eq.s32.totalorder %s15, 1
    %p190 = scmp.ne.s32.totalorder %s185, %s187
    %p191 = scmp.eq.s32.totalorder %s15, 0
    %p192 = por %p190, %p191
    %p193 = scmp.ne.s32.totalorder %s185, %s187
    %p194 = scmp.eq.s32.totalorder %s20, 1
    %p195 = por %p193, %p194
    %p196 = scmp.ne.s32.totalorder %s187, %s188
    %p197 = scmp.eq.s32.totalorder %s20, 0
    %p198 = por %p196, %p197
    %p199 = scmp.ne.s32.totalorder %s187, %s188
    %p200 = scmp.eq.s32.totalorder %s21, 1
    %p201 = por %p199, %p200
    %p203 = scmp.ne.s32.totalorder %s188, %s202
    %p204 = scmp.eq.s32.totalorder %s21, 0
    %p205 = por %p203, %p204
    %s207 = sadd.s32 %s206, 1
    %p210 = scmp.eq.s32.totalorder %s15, 1
    %p211 = scmp.ne.s32.totalorder %s206, %s208
    %p212 = scmp.eq.s32.totalorder %s15, 0
    %p213 = por %p211, %p212
    %p214 = scmp.ne.s32.totalorder %s206, %s208
    %p215 = scmp.eq.s32.totalorder %s20, 1
    %p216 = por %p214, %p215
    %p217 = scmp.ne.s32.totalorder %s208, %s209
    %p218 = scmp.eq.s32.totalorder %s20, 0
    %p219 = por %p217, %p218
    %p220 = scmp.ne.s32.totalorder %s208, %s209
    %p221 = scmp.eq.s32.totalorder %s21, 1
    %p222 = por %p220, %p221
    %p224 = scmp.ne.s32.totalorder %s209, %s223
    %p225 = scmp.eq.s32.totalorder %s21, 0
    %p226 = por %p224, %p225
    %s228 = sadd.s32 %s227, 1
    %p231 = scmp.eq.s32.totalorder %s15, 1
    %p232 = scmp.ne.s32.totalorder %s227, %s229
    %p233 = scmp.eq.s32.totalorder %s15, 0
    %p234 = por %p232, %p233
    %p235 = scmp.ne.s32.totalorder %s227, %s229
    %p236 = scmp.eq.s32.totalorder %s20, 1
    %p237 = por %p235, %p236
    %p238 = scmp.ne.s32.totalorder %s229, %s230
    %p239 = scmp.eq.s32.totalorder %s20, 0
    %p240 = por %p238, %p239
    %p241 = scmp.ne.s32.totalorder %s229, %s230
    %p242 = scmp.eq.s32.totalorder %s21, 1
    %p243 = por %p241, %p242
    %p245 = scmp.ne.s32.totalorder %s230, %s244
    %p246 = scmp.eq.s32.totalorder %s21, 0
    %p247 = por %p245, %p246
    %s248 = ssub.s32 %s22, %s34
    %s249 = ssub.s32 %s23, %s30
    %s250 = sor.u32 %s248, %s249
    %p251 = scmp.eq.s32.totalorder %s250, 0
    %s253 = sadd.s32 %s252, 1
    %s254 = scalar_select %p251, %s252, %s253
    %p257 = pneg %p251
    %p258 = scmp.eq.s32.totalorder %s15, 1
    %p259 = por %p257, %p258
    %p260 = scmp.ne.s32.totalorder %s252, %s255
    %p261 = scmp.eq.s32.totalorder %s15, 0
    %p262 = por %p260, %p261
    %p263 = scmp.ne.s32.totalorder %s252, %s255
    %p264 = scmp.eq.s32.totalorder %s20, 1
    %p265 = por %p263, %p264
    %p266 = scmp.ne.s32.totalorder %s255, %s256
    %p267 = scmp.eq.s32.totalorder %s20, 0
    %p268 = por %p266, %p267
    %p269 = scmp.ne.s32.totalorder %s255, %s256
    %p270 = scmp.eq.s32.totalorder %s21, 1
    %p271 = por %p269, %p270
    %p273 = scmp.ne.s32.totalorder %s256, %s272
    %p274 = scmp.eq.s32.totalorder %s21, 0
    %p275 = por %p273, %p274
    %p276 = scmp.le.s32.totalorder 1, %s15
    %p277 = scmp.lt.s32.totalorder %s15, 3
    %p278 = pnand %p276, %p277
    %p279 = pneg %p278
    // Predicated region
    $region9: #{model_forward.2} parent=5 // pred_check
      _
    $region10: #{model_forward.2} parent=5 // pred_check_branch
      %281 = sbr.rel (%p278) target = $region12
    $region11: #{model_forward.2} parent=5 // pred_region
      %s282 = ssub.s32 %s15, 1
      // Predicated region
      $region13: #{model_forward.2} parent=11 // pred_check
        %p283 = pneg %p156
      $region14: #{model_forward.2} parent=11 // pred_check_branch
        %285 = sbr.rel (%p283) target = $region16
      $region15: #{model_forward.2} parent=11 // pred_region
        _
      $region16: #{model_forward.2} parent=11 // pred_fallthru
        _
      // Predicated region
      $region17: #{model_forward.2} parent=11 // pred_check
        %p286 = pneg %p177
      $region18: #{model_forward.2} parent=11 // pred_check_branch
        %288 = sbr.rel (%p286) target = $region20
      $region19: #{model_forward.2} parent=11 // pred_region
        _
      $region20: #{model_forward.2} parent=11 // pred_fallthru
        _
      // Predicated region
      $region21: #{model_forward.2} parent=11 // pred_check
        %p289 = pneg %p198
      $region22: #{model_forward.2} parent=11 // pred_check_branch
        %291 = sbr.rel (%p289) target = $region24
      $region23: #{model_forward.2} parent=11 // pred_region
        _
      $region24: #{model_forward.2} parent=11 // pred_fallthru
        _
      // Predicated region
      $region25: #{model_forward.2} parent=11 // pred_check
        %p292 = pneg %p219
      $region26: #{model_forward.2} parent=11 // pred_check_branch
        %294 = sbr.rel (%p292) target = $region28
      $region27: #{model_forward.2} parent=11 // pred_region
        _
      $region28: #{model_forward.2} parent=11 // pred_fallthru
        _
      // Predicated region
      $region29: #{model_forward.2} parent=11 // pred_check
        %p295 = pneg %p240
      $region30: #{model_forward.2} parent=11 // pred_check_branch
        %297 = sbr.rel (%p295) target = $region32
      $region31: #{model_forward.2} parent=11 // pred_region
        _
      $region32: #{model_forward.2} parent=11 // pred_fallthru
        _
    $region12: #{model_forward.2} parent=5 // pred_fallthru
      _
    %p298 = scmp.lt.s32.totalorder %s15, 2
    // Predicated region
    $region33: #{model_forward.2} parent=5 // pred_check
      %p299 = pneg %p298
    $region34: #{model_forward.2} parent=5 // pred_check_branch
      %301 = sbr.rel (%p299) target = $region36
    $region35: #{model_forward.2} parent=5 // pred_region
      // Predicated region
      $region37: #{model_forward.2} parent=35 // pred_check
        %p302 = pneg %p47
      $region38: #{model_forward.2} parent=35 // pred_check_branch
        %304 = sbr.rel (%p302) target = $region40
      $region39: #{model_forward.2} parent=35 // pred_region
        %p305 = scmp.lt.s32.totalorder %s22, 1
        %s306 = scalar_select %p305, %s22, 1
        %s307 = smul.addr %s306, 4
        %s308 = scalar_lea.vmem %s0, %s307
      $region40: #{model_forward.2} parent=35 // pred_fallthru
        _
      // Predicated region
      $region41: #{model_forward.2} parent=35 // pred_check
        %p309 = pneg %p75
      $region42: #{model_forward.2} parent=35 // pred_check_branch
        %311 = sbr.rel (%p309) target = $region44
      $region43: #{model_forward.2} parent=35 // pred_region
        %s312 = smul.u32 2, %s23
        %p313 = scmp.lt.s32.totalorder %s22, 1
        %s314 = scalar_select %p313, %s22, 1
        %p315 = scmp.lt.s32.totalorder %s312, 1
        %s316 = scalar_select %p315, %s312, 1
        %s317 = smul.addr %s314, 2
        %s318 = sadd.s32 %s316, %s317
        %s319 = smul.addr %s318, 8
        %s320 = scalar_lea.vmem %s1, %s319
        %s321 = smul.u32 2, %s23
      $region44: #{model_forward.2} parent=35 // pred_fallthru
        _
      // Predicated region
      $region45: #{model_forward.2} parent=35 // pred_check
        %p322 = pneg %p101
      $region46: #{model_forward.2} parent=35 // pred_check_branch
        %324 = sbr.rel (%p322) target = $region48
      $region47: #{model_forward.2} parent=35 // pred_region
        %p325 = scmp.lt.s32.totalorder %s22, 1
        %s326 = scalar_select %p325, %s22, 1
        %s327 = smul.addr %s326, 2
        %s328 = smul.addr %s327, 8
        %s329 = scalar_lea.vmem %s2, %s328
      $region48: #{model_forward.2} parent=35 // pred_fallthru
        _
      // Predicated region
      $region49: #{model_forward.2} parent=35 // pred_check
        %p330 = pneg %p129
      $region50: #{model_forward.2} parent=35 // pred_check_branch
        %332 = sbr.rel (%p330) target = $region52
      $region51: #{model_forward.2} parent=35 // pred_region
        %s333 = smul.u32 2, %s23
        %p334 = scmp.lt.s32.totalorder %s22, 1
        %s335 = scalar_select %p334, %s22, 1
        %p336 = scmp.lt.s32.totalorder %s333, 1
        %s337 = scalar_select %p336, %s333, 1
        %s338 = smul.addr %s335, 2
        %s339 = sadd.s32 %s337, %s338
        %s340 = smul.addr %s339, 8
        %s341 = scalar_lea.vmem %s3, %s340
        %s342 = smul.u32 2, %s23
      $region52: #{model_forward.2} parent=35 // pred_fallthru
        _
    $region36: #{model_forward.2} parent=5 // pred_fallthru
      _
    %p343 = scmp.le.s32.totalorder 1, %s15
    %p344 = scmp.lt.s32.totalorder %s15, 3
    %p345 = pnand %p343, %p344
    %p346 = pneg %p345
    // Predicated region
    $region53: #{model_forward.2} parent=5 // pred_check
      _
    $region54: #{model_forward.2} parent=5 // pred_check_branch
      %348 = sbr.rel (%p345) target = $region56
    $region55: #{model_forward.2} parent=5 // pred_region
      %s349 = ssub.s32 %s15, 1
      %p350 = scmp.lt.s32.totalorder %s24, 1
      %s351 = scalar_select %p350, %s24, 1
      %s352 = smul.addr %s351, 4
      %s353 = scalar_lea.vmem %s0, %s352
      %p354 = pneg %p53
      %p355 = pneg %p50
      %s356 = smul.u32 2, %s25
      %p357 = scmp.lt.s32.totalorder %s24, 1
      %s358 = scalar_select %p357, %s24, 1
      %p359 = scmp.lt.s32.totalorder %s356, 1
      %s360 = scalar_select %p359, %s356, 1
      %s361 = smul.addr %s358, 2
      %s362 = sadd.s32 %s360, %s361
      %s363 = smul.addr %s362, 8
      %s364 = scalar_lea.vmem %s1, %s363
      %p365 = pneg %p81
      %p366 = pneg %p78
      %p367 = scmp.lt.s32.totalorder %s24, 1
      %s368 = scalar_select %p367, %s24, 1
      %s369 = smul.addr %s368, 2
      %s370 = smul.addr %s369, 8
      %s371 = scalar_lea.vmem %s2, %s370
      %p372 = pneg %p107
      %p373 = pneg %p104
      %s374 = smul.u32 2, %s25
      %p375 = scmp.lt.s32.totalorder %s24, 1
      %s376 = scalar_select %p375, %s24, 1
      %p377 = scmp.lt.s32.totalorder %s374, 1
      %s378 = scalar_select %p377, %s374, 1
      %s379 = smul.addr %s376, 2
      %s380 = sadd.s32 %s378, %s379
      %s381 = smul.addr %s380, 8
      %s382 = scalar_lea.vmem %s3, %s381
      %p383 = pneg %p135
      %p384 = pneg %p132
      %p385 = pneg %p156
      %p386 = pneg %p153
      %p387 = pneg %p177
      %p388 = pneg %p174
      %p389 = pneg %p198
      %p390 = pneg %p195
      %p391 = pneg %p219
      %p392 = pneg %p216
      %p393 = pneg %p240
      %p394 = pneg %p237
      %p395 = pneg %p268
      %p396 = pneg %p265
      %s397 = smul.u32 2, %s25
      %p398 = scmp.lt.s32.totalorder %s24, 1
      %s399 = scalar_select %p398, %s24, 1
      %p400 = scmp.lt.s32.totalorder %s397, 1
      %s401 = scalar_select %p400, %s397, 1
      %s402 = smul.addr %s399, 2
      %s403 = sadd.s32 %s401, %s402
      %s404 = smul.addr %s403, 8
      %s405 = scalar_lea.vmem %s9, %s404
      %p406 = scmp.lt.s32.totalorder %s24, 1
      %s407 = scalar_select %p406, %s24, 1
      %s408 = smul.addr %s407, 4
      %s409 = scalar_lea.vmem %s0, %s408
      %s410 = smul.u32 2, %s25
      %p411 = scmp.lt.s32.totalorder %s24, 1
      %s412 = scalar_select %p411, %s24, 1
      %p413 = scmp.lt.s32.totalorder %s410, 1
      %s414 = scalar_select %p413, %s410, 1
      %s415 = smul.addr %s412, 2
      %s416 = sadd.s32 %s414, %s415
      %s417 = smul.addr %s416, 8
      %s418 = scalar_lea.vmem %s1, %s417
      %s419 = smul.u32 2, %s25
      %p420 = scmp.lt.s32.totalorder %s24, 1
      %s421 = scalar_select %p420, %s24, 1
      %s422 = smul.addr %s421, 2
      %s423 = smul.addr %s422, 8
      %s424 = scalar_lea.vmem %s2, %s423
      %s425 = smul.u32 2, %s25
      %p426 = scmp.lt.s32.totalorder %s24, 1
      %s427 = scalar_select %p426, %s24, 1
      %p428 = scmp.lt.s32.totalorder %s425, 1
      %s429 = scalar_select %p428, %s425, 1
      %s430 = smul.addr %s427, 2
      %s431 = sadd.s32 %s429, %s430
      %s432 = smul.addr %s431, 8
      %s433 = scalar_lea.vmem %s3, %s432
      %s434 = smul.u32 2, %s25
      %s435 = smul.u32 2, %s25
      %p436 = scmp.lt.s32.totalorder %s24, 1
      %s437 = scalar_select %p436, %s24, 1
      %p438 = scmp.lt.s32.totalorder %s435, 1
      %s439 = scalar_select %p438, %s435, 1
      %s440 = smul.addr %s437, 2
      %s441 = sadd.s32 %s439, %s440
      %s442 = smul.addr %s441, 8
      %s443 = scalar_lea.vmem %s9, %s442
      %s444 = smul.u32 2, %s25
      %v446 = vld [vmem:[%s409] sm:$0x7]
      %v447 = vld [vmem:[%s418] sm:$0xff]
      %v448 = vld [vmem:[%s418 + $0x8] sm:$0xff]
      %v449 = vld [vmem:[%s424] sm:$0xff]
      %v450 = vld [vmem:[%s424 + $0x8] sm:$0xff]
      %v451 = vld [vmem:[%s433] sm:$0xff]
      %v452 = vld [vmem:[%s433 + $0x8] sm:$0xff]
      %v453 = vmul.f32 %v447, %v447
      %v454 = vmul.f32 %v448, %v448
      %vm455 = vcmask 23552
      %v456 = vsel %vm455, %v453, 0.0
      %457 = vadd.xlane.f32.xlu0 %v456
      %v458 = vpop.xlane.xlu0 %457
      %v459 = vsel %vm455, %v454, 0.0
      %460 = vadd.xlane.f32.xlu0 %v459
      %v461 = vpop.xlane.xlu0 %460
      %v462 = vmul.f32 %v446, %v446
      %vm463 = vcmask 124928
      %v464 = vsel %vm463, %v462, 0.0
      %v465 = vrot.slane %v464, 4
      %v466 = vadd.f32 %v464, %v465
      %v467 = vrot.slane %v466, 2
      %v468 = vadd.f32 %v466, %v467
      %v469 = vrot.slane %v468, 1
      %v470 = vadd.f32 %v468, %v469
      %v472 = vsel %vm455, %v447, 0
      %v475 = vsel %vm455, %v448, 0
      %vm477 = vcmask 1042432
      %v479 = vsel %vm477, %v446, 0
      %481 = vmatprep.subr.mxu0 0.0
      %482 = vmatpush1.msra.mxu0 0.0
      %483 = vmatprep.subr.mxu0 0.0
      %484 = vmatpush1.msra.mxu0 0.0
      %485 = vmatprep.subr.mxu0 0.0
      %486 = vmatpush1.msra.mxu0 0.0
      %487 = vmatprep.subr.mxu0 0.0
      %488 = vmatpush1.msra.mxu0 0.0
      %489 = vmatprep.subr.mxu0 0.0
      %490 = vmatpush1.msra.mxu0 0.0
      %491 = vmatprep.subr.mxu0 0.0
      %492 = vmatpush1.msra.mxu0 0.0
      %493 = vmatprep.subr.mxu0 0.0
      %494 = vmatpush1.msra.mxu0 0.0
      %495 = vmatprep.subr.mxu0 0.0
      %496 = vmatpush1.msra.mxu0 0.0
      %497 = vmatprep.subr.mxu0 0.0
      %498 = vmatpush1.msra.mxu0 0.0
      %499 = vmatprep.subr.mxu0 0.0
      %500 = vmatpush1.msra.mxu0 0.0
      %501 = vmatprep.subr.mxu0 0.0
      %502 = vmatpush1.msra.mxu0 0.0
      %503 = vmatprep.subr.mxu0 0.0
      %504 = vmatpush1.msra.mxu0 0.0
      %505 = vmatprep.subr.mxu0 0.0
      %506 = vmatpush1.msra.mxu0 0.0
      %507 = vmatprep.subr.mxu0 0.0
      %508 = vmatpush1.msra.mxu0 0.0
      %509 = vmatprep.subr.mxu0 0.0
      %510 = vmatpush1.msra.mxu0 0.0
      %511 = vmatprep.subr.mxu0 0.0
      %512 = vmatpush1.msra.mxu0 %v479
      %513 = vmatprep.subr.mxu0 0.0
      %514 = vmatpush2.msra.mxu0 0.0
      %515 = vmatprep.subr.mxu0 0.0
      %516 = vmatpush2.msra.mxu0 0.0
      %517 = vmatprep.subr.mxu0 0.0
      %518 = vmatpush2.msra.mxu0 0.0
      %519 = vmatprep.subr.mxu0 0.0
      %520 = vmatpush2.msra.mxu0 0.0
      %521 = vmatprep.subr.mxu0 0.0
      %522 = vmatpush2.msra.mxu0 0.0
      %523 = vmatprep.subr.mxu0 0.0
      %524 = vmatpush2.msra.mxu0 0.0
      %525 = vmatprep.subr.mxu0 0.0
      %526 = vmatpush2.msra.mxu0 0.0
      %527 = vmatprep.subr.mxu0 0.0
      %528 = vmatpush2.msra.mxu0 0.0
      %529 = vmatprep.subr.mxu0 0.0
      %530 = vmatpush2.msra.mxu0 0.0
      %531 = vmatprep.subr.mxu0 0.0
      %532 = vmatpush2.msra.mxu0 0.0
      %533 = vmatprep.subr.mxu0 0.0
      %534 = vmatpush2.msra.mxu0 0.0
      %535 = vmatprep.subr.mxu0 0.0
      %536 = vmatpush2.msra.mxu0 0.0
      %537 = vmatprep.subr.mxu0 0.0
      %538 = vmatpush2.msra.mxu0 0.0
      %539 = vmatprep.subr.mxu0 0.0
      %540 = vmatpush2.msra.mxu0 0.0
      %541 = vmatprep.subr.mxu0 0.0
      %542 = vmatpush2.msra.mxu0 0.0
      %543 = vmatprep.subr.mxu0 0.0
      %544 = vmatpush2.msra.mxu0 0.0
      %545 = vmatprep.mubr.f32.mxu0 0.0
      %546 = vmatmul.mubr.f32.gmra.mxu0 %v472
      %v547 = vpop.f32.mrf.mxu0
      %v548 = vadd.f32 0.0, %v547
      %v549 = vpop.f32.mrf.mxu0
      %550 = vmatprep.mubr.f32.mxu0 0.0
      %551 = vmatmul.mubr.f32.gmra.mxu0 %v475
      %v552 = vpop.f32.mrf.mxu0
      %v553 = vadd.f32 0.0, %v552
      %v554 = vpop.f32.mrf.mxu0
      %555 = vdwg.mxu0
      %v556 = vadd.f32 %v458, %v470
      %v557 = vadd.f32 %v461, %v470
      %v558 = vmul.f32 %v548, 2.0
      %v559 = vmul.f32 %v553, 2.0
      %v560 = vsub.f32 %v556, %v558
      %v561 = vsub.f32 %v557, %v559
      %v562 = vlaneseq
      %v563 = vshrl.u32 %v562, 7
      %v564 = vadd.s32 %v563, 8
      %s565 = smul.u32 %s25, 16
      %v566 = vstv %s565
      %v567 = vadd.s32 %v563, %v566
      %v568 = vadd.s32 %v564, %v566
      %v569 = vlaneseq
      %v570 = vand.u32 %v569, 127
      %vm571 = vcmp.eq.s32.totalorder %v567, %v570
      %vm572 = vcmp.eq.s32.totalorder %v568, %v570
      %v573 = vsel %vm571, 1e+30, %v560
      %v574 = vsel %vm572, 1e+30, %v561
      %v575 = vcvt.s32.f32 %v570
      %v576 = vpack.c.bf16 %v450, %v449
      %v577 = vld [vmem:[%s4] sm:$0x3]
      %vm578 = vcmask 31744
      %v580 = vsel %vm578, %v576, 0
      %vm582 = vcmask 1041408
      %v584 = vsel %vm582, %v577, 0
      %586 = vmatprep.subr.bf16.mxu0 0
      %587 = vmatpush1.bf16.msra.mxu0 0
      %588 = vmatprep.subr.bf16.mxu0 0
      %589 = vmatpush1.bf16.msra.mxu0 0
      %590 = vmatprep.subr.bf16.mxu0 0
      %591 = vmatpush1.bf16.msra.mxu0 0
      %592 = vmatprep.subr.bf16.mxu0 0
      %593 = vmatpush1.bf16.msra.mxu0 0
      %594 = vmatprep.subr.bf16.mxu0 0
      %595 = vmatpush1.bf16.msra.mxu0 0
      %596 = vmatprep.subr.bf16.mxu0 0
      %597 = vmatpush1.bf16.msra.mxu0 0
      %598 = vmatprep.subr.bf16.mxu0 0
      %599 = vmatpush1.bf16.msra.mxu0 0
      %600 = vmatprep.subr.bf16.mxu0 0
      %601 = vmatpush1.bf16.msra.mxu0 %v584
      %602 = vmatprep.subr.bf16.mxu0 0
      %603 = vmatpush2.bf16.msra.mxu0 0
      %604 = vmatprep.subr.bf16.mxu0 0
      %605 = vmatpush2.bf16.msra.mxu0 0
      %606 = vmatprep.subr.bf16.mxu0 0
      %607 = vmatpush2.bf16.msra.mxu0 0
      %608 = vmatprep.subr.bf16.mxu0 0
      %609 = vmatpush2.bf16.msra.mxu0 0
      %610 = vmatprep.subr.bf16.mxu0 0
      %611 = vmatpush2.bf16.msra.mxu0 0
      %612 = vmatprep.subr.bf16.mxu0 0
      %613 = vmatpush2.bf16.msra.mxu0 0
      %614 = vmatprep.subr.bf16.mxu0 0
      %615 = vmatpush2.bf16.msra.mxu0 0
      %616 = vmatprep.subr.bf16.mxu0 0
      %617 = vmatpush2.bf16.msra.mxu0 0
      %618 = vmatprep.mubr.bf16.mxu0 0
      %619 = vmatmul.mubr.bf16.gmra.mxu0 %v580
      %v620 = vpop.f32.mrf.mxu0
      %v621 = vadd.f32 0.0, %v620
      %v622 = vpop.f32.mrf.mxu0
      %v623 = vpop.f32.mrf.mxu0
      %v624 = vadd.f32 0.0, %v623
      %v625 = vpop.f32.mrf.mxu0
      %626 = vdwg.mxu0
      %v627 = vpack.c.bf16 %v624, %v621
      %v628 = vpack.c.bf16 %v452, %v451
      %v629 = vld [vmem:[%s5] sm:$0x3]
      %v630 = vld [vmem:[%s7] sm:$0x1]
      %v632 = vlaneseq
      %v633 = vshrl.u32 %v632, 7
      %v634 = vsub.s32 0, %v633
      %v635 = vrot.slane %v630, %v634
      %v638 = vsel %vm578, %v628, 0
      %v641 = vsel %vm582, %v629, 0
      %643 = vmatprep.subr.bf16.mxu0 0
      %644 = vmatpush1.bf16.msra.mxu0 0
      %645 = vmatprep.subr.bf16.mxu0 0
      %646 = vmatpush1.bf16.msra.mxu0 0
      %647 = vmatprep.subr.bf16.mxu0 0
      %648 = vmatpush1.bf16.msra.mxu0 0
      %649 = vmatprep.subr.bf16.mxu0 0
      %650 = vmatpush1.bf16.msra.mxu0 0
      %651 = vmatprep.subr.bf16.mxu0 0
      %652 = vmatpush1.bf16.msra.mxu0 0
      %653 = vmatprep.subr.bf16.mxu0 0
      %654 = vmatpush1.bf16.msra.mxu0 0
      %655 = vmatprep.subr.bf16.mxu0 0
      %656 = vmatpush1.bf16.msra.mxu0 0
      %657 = vmatprep.subr.bf16.mxu0 0
      %658 = vmatpush1.bf16.msra.mxu0 %v641
      %659 = vmatprep.subr.bf16.mxu0 0
      %660 = vmatpush2.bf16.msra.mxu0 0
      %661 = vmatprep.subr.bf16.mxu0 0
      %662 = vmatpush2.bf16.msra.mxu0 0
      %663 = vmatprep.subr.bf16.mxu0 0
      %664 = vmatpush2.bf16.msra.mxu0 0
      %665 = vmatprep.subr.bf16.mxu0 0
      %666 = vmatpush2.bf16.msra.mxu0 0
      %667 = vmatprep.subr.bf16.mxu0 0
      %668 = vmatpush2.bf16.msra.mxu0 0
      %669 = vmatprep.subr.bf16.mxu0 0
      %670 = vmatpush2.bf16.msra.mxu0 0
      %671 = vmatprep.subr.bf16.mxu0 0
      %672 = vmatpush2.bf16.msra.mxu0 0
      %673 = vmatprep.subr.bf16.mxu0 0
      %674 = vmatpush2.bf16.msra.mxu0 0
      %675 = vmatprep.mubr.bf16.mxu0 0
      %676 = vmatmul.mubr.bf16.gmra.mxu0 %v638
      %v677 = vpop.f32.mrf.mxu0
      %v678 = vadd.f32 %v635, %v677
      %v679 = vpop.f32.mrf.mxu0
      %v680 = vpop.f32.mrf.mxu0
      %v681 = vadd.f32 %v635, %v680
      %v682 = vpop.f32.mrf.mxu0
      %683 = vdwg.mxu0
      %v684 = vld [vmem:[%s6] sm:$0xf]
      %v685 = vld [vmem:[%s6 + $0x4] sm:$0xf]
      %v686 = vld [vmem:[%s6 + $0x8] sm:$0xf]
      %v687 = vld [vmem:[%s6 + $0xc] sm:$0xf]
      %v688 = vld [vmem:[%s8] sm:$0x1]
      %v690 = vlaneseq
      %v691 = vshrl.u32 %v690, 7
      %v692 = vsub.s32 0, %v691
      %v693 = vrot.slane %v688, %v692
      %vm695 = vcmask 130048
      %v696 = vsel %vm695, %v573, inf
      %697 = vmin.xlane.f32.xlu0 %v696
      %v698 = vpop.xlane.xlu0 %697
      %v699 = vsel %vm695, %v574, inf
      %700 = vmin.xlane.f32.xlu0 %v699
      %v701 = vpop.xlane.xlu0 %700
      %vm702 = vcmp.le.f32.partialorder %v573, %v698
      %vm703 = vcmp.le.f32.partialorder %v574, %v701
      %v704 = vsel %vm702, %v575, 16.0
      %v705 = vsel %vm703, %v575, 16.0
      %v706 = vsel %vm695, %v704, inf
      %707 = vmin.xlane.f32.xlu0 %v706
      %v708 = vpop.xlane.xlu0 %707
      %v709 = vsel %vm695, %v705, inf
      %710 = vmin.xlane.f32.xlu0 %v709
      %v711 = vpop.xlane.xlu0 %710
      %vm712 = vcmp.eq.f32.partialorder %v575, %v708
      %vm713 = vcmp.eq.f32.partialorder %v575, %v711
      %v714 = vsel %vm712, 1e+30, %v573
      %v715 = vsel %vm713, 1e+30, %v574
      %v716 = vsel %vm712, 1, 0
      %v717 = vsel %vm713, 1, 0
      %v718 = vcvt.s32.f32 %v716
      %v719 = vcvt.s32.f32 %v717
      %v720 = vpack.c.bf16 %v719, %v718
      %v722 = vsel %vm695, %v720, 0
      %724 = vmatprep.subr.bf16.mxu0 0
      %725 = vmatpush1.bf16.msra.mxu0 0
      %726 = vmatprep.subr.bf16.mxu0 0
      %727 = vmatpush1.bf16.msra.mxu0 0
      %728 = vmatprep.subr.bf16.mxu0 0
      %729 = vmatpush1.bf16.msra.mxu0 0
      %730 = vmatprep.subr.bf16.mxu0 0
      %731 = vmatpush1.bf16.msra.mxu0 0
      %732 = vmatprep.subr.bf16.mxu0 0
      %733 = vmatpush1.bf16.msra.mxu0 0
      %734 = vmatprep.subr.bf16.mxu0 0
      %735 = vmatpush1.bf16.msra.mxu0 0
      %736 = vmatprep.subr.bf16.mxu0 0
      %737 = vmatpush1.bf16.msra.mxu0 0
      %738 = vmatprep.subr.bf16.mxu0 0
      %739 = vmatpush1.bf16.msra.mxu0 %v627
      %740 = vmatprep.subr.bf16.mxu0 0
      %741 = vmatpush2.bf16.msra.mxu0 0
      %742 = vmatprep.subr.bf16.mxu0 0
      %743 = vmatpush2.bf16.msra.mxu0 0
      %744 = vmatprep.subr.bf16.mxu0 0
      %745 = vmatpush2.bf16.msra.mxu0 0
      %746 = vmatprep.subr.bf16.mxu0 0
      %747 = vmatpush2.bf16.msra.mxu0 0
      %748 = vmatprep.subr.bf16.mxu0 0
      %749 = vmatpush2.bf16.msra.mxu0 0
      %750 = vmatprep.subr.bf16.mxu0 0
      %751 = vmatpush2.bf16.msra.mxu0 0
      %752 = vmatprep.subr.bf16.mxu0 0
      %753 = vmatpush2.bf16.msra.mxu0 0
      %754 = vmatprep.subr.bf16.mxu0 0
      %755 = vmatpush2.bf16.msra.mxu0 0
      %756 = vmatprep.mubr.bf16.mxu0 0
      %757 = vmatmul.mubr.bf16.gmra.mxu0 %v722
      %v758 = vpop.f32.mrf.mxu0
      %v759 = vadd.f32 %v678, %v758
      %v760 = vpop.f32.mrf.mxu0
      %v761 = vpop.f32.mrf.mxu0
      %v762 = vadd.f32 %v681, %v761
      %v763 = vpop.f32.mrf.mxu0
      %764 = vdwg.mxu0
      %v765 = vmax.f32 %v759, 0.0
      %v766 = vmax.f32 %v762, 0.0
      %v767 = vpack.c.bf16 %v766, %v765
      %v772 = vunpack.c.l.b16 %v684
      %v773 = vunpack.c.l.b16 %v685
      %v774 = vunpack.c.l.b16 %v686
      %v775 = vunpack.c.l.b16 %v687
      %v776 = vpack.c.b16 %v773, %v772
      %v777 = vpack.c.b16 %v775, %v774
      %vm780 = vcmask 261120
      %v782 = vsel %vm780, %v767, 0
      %784 = vmatprep.subr.bf16.mxu0 0
      %785 = vmatpush1.bf16.msra.mxu0 0
      %786 = vmatprep.subr.bf16.mxu0 0
      %787 = vmatpush1.bf16.msra.mxu0 0
      %788 = vmatprep.subr.bf16.mxu0 0
      %789 = vmatpush1.bf16.msra.mxu0 0
      %790 = vmatprep.subr.bf16.mxu0 0
      %791 = vmatpush1.bf16.msra.mxu0 0
      %792 = vmatprep.subr.bf16.mxu0 0
      %793 = vmatpush1.bf16.msra.mxu0 0
      %794 = vmatprep.subr.bf16.mxu0 0
      %795 = vmatpush1.bf16.msra.mxu0 0
      %796 = vmatprep.subr.bf16.mxu0 0
      %797 = vmatpush1.bf16.msra.mxu0 %v777
      %798 = vmatprep.subr.bf16.mxu0 0
      %799 = vmatpush1.bf16.msra.mxu0 %v776
      %800 = vmatprep.subr.bf16.mxu0 0
      %801 = vmatpush2.bf16.msra.mxu0 0
      %802 = vmatprep.subr.bf16.mxu0 0
      %803 = vmatpush2.bf16.msra.mxu0 0
      %804 = vmatprep.subr.bf16.mxu0 0
      %805 = vmatpush2.bf16.msra.mxu0 0
      %806 = vmatprep.subr.bf16.mxu0 0
      %807 = vmatpush2.bf16.msra.mxu0 0
      %808 = vmatprep.subr.bf16.mxu0 0
      %809 = vmatpush2.bf16.msra.mxu0 0
      %810 = vmatprep.subr.bf16.mxu0 0
      %811 = vmatpush2.bf16.msra.mxu0 0
      %812 = vmatprep.subr.bf16.mxu0 0
      %813 = vmatpush2.bf16.msra.mxu0 0
      %814 = vmatprep.subr.bf16.mxu0 0
      %815 = vmatpush2.bf16.msra.mxu0 0
      %816 = vmatprep.mubr.bf16.mxu0 0
      %817 = vmatmul.mubr.bf16.gmra.mxu0 %v782
      %v818 = vpop.f32.mrf.mxu0
      %v819 = vadd.f32 %v693, %v818
      %v820 = vpop.f32.mrf.mxu0
      %v821 = vpop.f32.mrf.mxu0
      %v822 = vadd.f32 %v693, %v821
      %v823 = vpop.f32.mrf.mxu0
      %824 = vdwg.mxu0
      %v825 = vmax.f32 %v819, 0.0
      %v826 = vmax.f32 %v822, 0.0
      %v827 = vsel %vm695, %v714, inf
      %828 = vmin.xlane.f32.xlu0 %v827
      %v829 = vpop.xlane.xlu0 %828
      %v830 = vsel %vm695, %v715, inf
      %831 = vmin.xlane.f32.xlu0 %v830
      %v832 = vpop.xlane.xlu0 %831
      %vm833 = vcmp.le.f32.partialorder %v714, %v829
      %vm834 = vcmp.le.f32.partialorder %v715, %v832
      %v835 = vsel %vm833, %v575, 16.0
      %v836 = vsel %vm834, %v575, 16.0
      %v837 = vsel %vm695, %v835, inf
      %838 = vmin.xlane.f32.xlu0 %v837
      %v839 = vpop.xlane.xlu0 %838
      %v840 = vsel %vm695, %v836, inf
      %841 = vmin.xlane.f32.xlu0 %v840
      %v842 = vpop.xlane.xlu0 %841
      %vm843 = vcmp.eq.f32.partialorder %v575, %v839
      %vm844 = vcmp.eq.f32.partialorder %v575, %v842
      %v845 = vsel %vm843, 1e+30, %v714
      %v846 = vsel %vm844, 1e+30, %v715
      %v847 = vsel %vm843, 1, 0
      %v848 = vsel %vm844, 1, 0
      %v849 = vcvt.s32.f32 %v847
      %v850 = vcvt.s32.f32 %v848
      %v851 = vpack.c.bf16 %v850, %v849
      %v853 = vsel %vm695, %v851, 0
      %855 = vmatprep.subr.bf16.mxu0 0
      %856 = vmatpush1.bf16.msra.mxu0 0
      %857 = vmatprep.subr.bf16.mxu0 0
      %858 = vmatpush1.bf16.msra.mxu0 0
      %859 = vmatprep.subr.bf16.mxu0 0
      %860 = vmatpush1.bf16.msra.mxu0 0
      %861 = vmatprep.subr.bf16.mxu0 0
      %862 = vmatpush1.bf16.msra.mxu0 0
      %863 = vmatprep.subr.bf16.mxu0 0
      %864 = vmatpush1.bf16.msra.mxu0 0
      %865 = vmatprep.subr.bf16.mxu0 0
      %866 = vmatpush1.bf16.msra.mxu0 0
      %867 = vmatprep.subr.bf16.mxu0 0
      %868 = vmatpush1.bf16.msra.mxu0 0
      %869 = vmatprep.subr.bf16.mxu0 0
      %870 = vmatpush1.bf16.msra.mxu0 %v627
      %871 = vmatprep.subr.bf16.mxu0 0
      %872 = vmatpush2.bf16.msra.mxu0 0
      %873 = vmatprep.subr.bf16.mxu0 0
      %874 = vmatpush2.bf16.msra.mxu0 0
      %875 = vmatprep.subr.bf16.mxu0 0
      %876 = vmatpush2.bf16.msra.mxu0 0
      %877 = vmatprep.subr.bf16.mxu0 0
      %878 = vmatpush2.bf16.msra.mxu0 0
      %879 = vmatprep.subr.bf16.mxu0 0
      %880 = vmatpush2.bf16.msra.mxu0 0
      %881 = vmatprep.subr.bf16.mxu0 0
      %882 = vmatpush2.bf16.msra.mxu0 0
      %883 = vmatprep.subr.bf16.mxu0 0
      %884 = vmatpush2.bf16.msra.mxu0 0
      %885 = vmatprep.subr.bf16.mxu0 0
      %886 = vmatpush2.bf16.msra.mxu0 0
      %887 = vmatprep.mubr.bf16.mxu0 0
      %888 = vmatmul.mubr.bf16.gmra.mxu0 %v853
      %v889 = vpop.f32.mrf.mxu0
      %v890 = vadd.f32 %v678, %v889
      %v891 = vpop.f32.mrf.mxu0
      %v892 = vpop.f32.mrf.mxu0
      %v893 = vadd.f32 %v681, %v892
      %v894 = vpop.f32.mrf.mxu0
      %895 = vdwg.mxu0
      %v896 = vmax.f32 %v890, 0.0
      %v897 = vmax.f32 %v893, 0.0
      %v898 = vpack.c.bf16 %v897, %v896
      %v900 = vsel %vm780, %v898, 0
      %902 = vmatprep.subr.bf16.mxu0 0
      %903 = vmatpush1.bf16.msra.mxu0 0
      %904 = vmatprep.subr.bf16.mxu0 0
      %905 = vmatpush1.bf16.msra.mxu0 0
      %906 = vmatprep.subr.bf16.mxu0 0
      %907 = vmatpush1.bf16.msra.mxu0 0
      %908 = vmatprep.subr.bf16.mxu0 0
      %909 = vmatpush1.bf16.msra.mxu0 0
      %910 = vmatprep.subr.bf16.mxu0 0
      %911 = vmatpush1.bf16.msra.mxu0 0
      %912 = vmatprep.subr.bf16.mxu0 0
      %913 = vmatpush1.bf16.msra.mxu0 0
      %914 = vmatprep.subr.bf16.mxu0 0
      %915 = vmatpush1.bf16.msra.mxu0 %v777
      %916 = vmatprep.subr.bf16.mxu0 0
      %917 = vmatpush1.bf16.msra.mxu0 %v776
      %918 = vmatprep.subr.bf16.mxu0 0
      %919 = vmatpush2.bf16.msra.mxu0 0
      %920 = vmatprep.subr.bf16.mxu0 0
      %921 = vmatpush2.bf16.msra.mxu0 0
      %922 = vmatprep.subr.bf16.mxu0 0
      %923 = vmatpush2.bf16.msra.mxu0 0
      %924 = vmatprep.subr.bf16.mxu0 0
      %925 = vmatpush2.bf16.msra.mxu0 0
      %926 = vmatprep.subr.bf16.mxu0 0
      %927 = vmatpush2.bf16.msra.mxu0 0
      %928 = vmatprep.subr.bf16.mxu0 0
      %929 = vmatpush2.bf16.msra.mxu0 0
      %930 = vmatprep.subr.bf16.mxu0 0
      %931 = vmatpush2.bf16.msra.mxu0 0
      %932 = vmatprep.subr.bf16.mxu0 0
      %933 = vmatpush2.bf16.msra.mxu0 0
      %934 = vmatprep.mubr.bf16.mxu0 0
      %935 = vmatmul.mubr.bf16.gmra.mxu0 %v900
      %v936 = vpop.f32.mrf.mxu0
      %v937 = vadd.f32 %v693, %v936
      %v938 = vpop.f32.mrf.mxu0
      %v939 = vpop.f32.mrf.mxu0
      %v940 = vadd.f32 %v693, %v939
      %v941 = vpop.f32.mrf.mxu0
      %942 = vdwg.mxu0
      %v943 = vmax.f32 %v937, 0.0
      %v944 = vmax.f32 %v940, 0.0
      %v945 = vmax.f32 %v825, %v943
      %v946 = vmax.f32 %v826, %v944
      %v947 = vsel %vm695, %v845, inf
      %948 = vmin.xlane.f32.xlu0 %v947
      %v949 = vpop.xlane.xlu0 %948
      %v950 = vsel %vm695, %v846, inf
      %951 = vmin.xlane.f32.xlu0 %v950
      %v952 = vpop.xlane.xlu0 %951
      %vm953 = vcmp.le.f32.partialorder %v845, %v949
      %vm954 = vcmp.le.f32.partialorder %v846, %v952
      %v955 = vsel %vm953, %v575, 16.0
      %v956 = vsel %vm954, %v575, 16.0
      %v957 = vsel %vm695, %v955, inf
      %958 = vmin.xlane.f32.xlu0 %v957
      %v959 = vpop.xlane.xlu0 %958
      %v960 = vsel %vm695, %v956, inf
      %961 = vmin.xlane.f32.xlu0 %v960
      %v962 = vpop.xlane.xlu0 %961
      %vm963 = vcmp.eq.f32.partialorder %v575, %v959
      %vm964 = vcmp.eq.f32.partialorder %v575, %v962
      %v965 = vsel %vm963, 1e+30, %v845
      %v966 = vsel %vm964, 1e+30, %v846
      %v967 = vsel %vm963, 1, 0
      %v968 = vsel %vm964, 1, 0
      %v969 = vcvt.s32.f32 %v967
      %v970 = vcvt.s32.f32 %v968
      %v971 = vpack.c.bf16 %v970, %v969
      %v973 = vsel %vm695, %v971, 0
      %975 = vmatprep.subr.bf16.mxu0 0
      %976 = vmatpush1.bf16.msra.mxu0 0
      %977 = vmatprep.subr.bf16.mxu0 0
      %978 = vmatpush1.bf16.msra.mxu0 0
      %979 = vmatprep.subr.bf16.mxu0 0
      %980 = vmatpush1.bf16.msra.mxu0 0
      %981 = vmatprep.subr.bf16.mxu0 0
      %982 = vmatpush1.bf16.msra.mxu0 0
      %983 = vmatprep.subr.bf16.mxu0 0
      %984 = vmatpush1.bf16.msra.mxu0 0
      %985 = vmatprep.subr.bf16.mxu0 0
      %986 = vmatpush1.bf16.msra.mxu0 0
      %987 = vmatprep.subr.bf16.mxu0 0
      %988 = vmatpush1.bf16.msra.mxu0 0
      %989 = vmatprep.subr.bf16.mxu0 0
      %990 = vmatpush1.bf16.msra.mxu0 %v627
      %991 = vmatprep.subr.bf16.mxu0 0
      %992 = vmatpush2.bf16.msra.mxu0 0
      %993 = vmatprep.subr.bf16.mxu0 0
      %994 = vmatpush2.bf16.msra.mxu0 0
      %995 = vmatprep.subr.bf16.mxu0 0
      %996 = vmatpush2.bf16.msra.mxu0 0
      %997 = vmatprep.subr.bf16.mxu0 0
      %998 = vmatpush2.bf16.msra.mxu0 0
      %999 = vmatprep.subr.bf16.mxu0 0
      %1000 = vmatpush2.bf16.msra.mxu0 0
      %1001 = vmatprep.subr.bf16.mxu0 0
      %1002 = vmatpush2.bf16.msra.mxu0 0
      %1003 = vmatprep.subr.bf16.mxu0 0
      %1004 = vmatpush2.bf16.msra.mxu0 0
      %1005 = vmatprep.subr.bf16.mxu0 0
      %1006 = vmatpush2.bf16.msra.mxu0 0
      %1007 = vmatprep.mubr.bf16.mxu0 0
      %1008 = vmatmul.mubr.bf16.gmra.mxu0 %v973
      %v1009 = vpop.f32.mrf.mxu0
      %v1010 = vadd.f32 %v678, %v1009
      %v1011 = vpop.f32.mrf.mxu0
      %v1012 = vpop.f32.mrf.mxu0
      %v1013 = vadd.f32 %v681, %v1012
      %v1014 = vpop.f32.mrf.mxu0
      %1015 = vdwg.mxu0
      %v1016 = vmax.f32 %v1010, 0.0
      %v1017 = vmax.f32 %v1013, 0.0
      %v1018 = vpack.c.bf16 %v1017, %v1016
      %v1020 = vsel %vm780, %v1018, 0
      %1022 = vmatprep.subr.bf16.mxu0 0
      %1023 = vmatpush1.bf16.msra.mxu0 0
      %1024 = vmatprep.subr.bf16.mxu0 0
      %1025 = vmatpush1.bf16.msra.mxu0 0
      %1026 = vmatprep.subr.bf16.mxu0 0
      %1027 = vmatpush1.bf16.msra.mxu0 0
      %1028 = vmatprep.subr.bf16.mxu0 0
      %1029 = vmatpush1.bf16.msra.mxu0 0
      %1030 = vmatprep.subr.bf16.mxu0 0
      %1031 = vmatpush1.bf16.msra.mxu0 0
      %1032 = vmatprep.subr.bf16.mxu0 0
      %1033 = vmatpush1.bf16.msra.mxu0 0
      %1034 = vmatprep.subr.bf16.mxu0 0
      %1035 = vmatpush1.bf16.msra.mxu0 %v777
      %1036 = vmatprep.subr.bf16.mxu0 0
      %1037 = vmatpush1.bf16.msra.mxu0 %v776
      %1038 = vmatprep.subr.bf16.mxu0 0
      %1039 = vmatpush2.bf16.msra.mxu0 0
      %1040 = vmatprep.subr.bf16.mxu0 0
      %1041 = vmatpush2.bf16.msra.mxu0 0
      %1042 = vmatprep.subr.bf16.mxu0 0
      %1043 = vmatpush2.bf16.msra.mxu0 0
      %1044 = vmatprep.subr.bf16.mxu0 0
      %1045 = vmatpush2.bf16.msra.mxu0 0
      %1046 = vmatprep.subr.bf16.mxu0 0
      %1047 = vmatpush2.bf16.msra.mxu0 0
      %1048 = vmatprep.subr.bf16.mxu0 0
      %1049 = vmatpush2.bf16.msra.mxu0 0
      %1050 = vmatprep.subr.bf16.mxu0 0
      %1051 = vmatpush2.bf16.msra.mxu0 0
      %1052 = vmatprep.subr.bf16.mxu0 0
      %1053 = vmatpush2.bf16.msra.mxu0 0
      %1054 = vmatprep.mubr.bf16.mxu0 0
      %1055 = vmatmul.mubr.bf16.gmra.mxu0 %v1020
      %v1056 = vpop.f32.mrf.mxu0
      %v1057 = vadd.f32 %v693, %v1056
      %v1058 = vpop.f32.mrf.mxu0
      %v1059 = vpop.f32.mrf.mxu0
      %v1060 = vadd.f32 %v693, %v1059
      %v1061 = vpop.f32.mrf.mxu0
      %1062 = vdwg.mxu0
      %v1063 = vmax.f32 %v1057, 0.0
      %v1064 = vmax.f32 %v1060, 0.0
      %v1065 = vmax.f32 %v945, %v1063
      %v1066 = vmax.f32 %v946, %v1064
      %v1067 = vsel %vm695, %v965, inf
      %1068 = vmin.xlane.f32.xlu0 %v1067
      %v1069 = vpop.xlane.xlu0 %1068
      %v1070 = vsel %vm695, %v966, inf
      %1071 = vmin.xlane.f32.xlu0 %v1070
      %v1072 = vpop.xlane.xlu0 %1071
      %vm1073 = vcmp.le.f32.partialorder %v965, %v1069
      %vm1074 = vcmp.le.f32.partialorder %v966, %v1072
      %v1075 = vsel %vm1073, %v575, 16.0
      %v1076 = vsel %vm1074, %v575, 16.0
      %v1077 = vsel %vm695, %v1075, inf
      %1078 = vmin.xlane.f32.xlu0 %v1077
      %v1079 = vpop.xlane.xlu0 %1078
      %v1080 = vsel %vm695, %v1076, inf
      %1081 = vmin.xlane.f32.xlu0 %v1080
      %v1082 = vpop.xlane.xlu0 %1081
      %vm1083 = vcmp.eq.f32.partialorder %v575, %v1079
      %vm1084 = vcmp.eq.f32.partialorder %v575, %v1082
      %v1085 = vsel %vm1083, 1, 0
      %v1086 = vsel %vm1084, 1, 0
      %v1087 = vcvt.s32.f32 %v1085
      %v1088 = vcvt.s32.f32 %v1086
      %v1089 = vpack.c.bf16 %v1088, %v1087
      %v1091 = vsel %vm695, %v1089, 0
      %1093 = vmatprep.subr.bf16.mxu0 0
      %1094 = vmatpush1.bf16.msra.mxu0 0
      %1095 = vmatprep.subr.bf16.mxu0 0
      %1096 = vmatpush1.bf16.msra.mxu0 0
      %1097 = vmatprep.subr.bf16.mxu0 0
      %1098 = vmatpush1.bf16.msra.mxu0 0
      %1099 = vmatprep.subr.bf16.mxu0 0
      %1100 = vmatpush1.bf16.msra.mxu0 0
      %1101 = vmatprep.subr.bf16.mxu0 0
      %1102 = vmatpush1.bf16.msra.mxu0 0
      %1103 = vmatprep.subr.bf16.mxu0 0
      %1104 = vmatpush1.bf16.msra.mxu0 0
      %1105 = vmatprep.subr.bf16.mxu0 0
      %1106 = vmatpush1.bf16.msra.mxu0 0
      %1107 = vmatprep.subr.bf16.mxu0 0
      %1108 = vmatpush1.bf16.msra.mxu0 %v627
      %1109 = vmatprep.subr.bf16.mxu0 0
      %1110 = vmatpush2.bf16.msra.mxu0 0
      %1111 = vmatprep.subr.bf16.mxu0 0
      %1112 = vmatpush2.bf16.msra.mxu0 0
      %1113 = vmatprep.subr.bf16.mxu0 0
      %1114 = vmatpush2.bf16.msra.mxu0 0
      %1115 = vmatprep.subr.bf16.mxu0 0
      %1116 = vmatpush2.bf16.msra.mxu0 0
      %1117 = vmatprep.subr.bf16.mxu0 0
      %1118 = vmatpush2.bf16.msra.mxu0 0
      %1119 = vmatprep.subr.bf16.mxu0 0
      %1120 = vmatpush2.bf16.msra.mxu0 0
      %1121 = vmatprep.subr.bf16.mxu0 0
      %1122 = vmatpush2.bf16.msra.mxu0 0
      %1123 = vmatprep.subr.bf16.mxu0 0
      %1124 = vmatpush2.bf16.msra.mxu0 0
      %1125 = vmatprep.mubr.bf16.mxu0 0
      %1126 = vmatmul.mubr.bf16.gmra.mxu0 %v1091
      %v1127 = vpop.f32.mrf.mxu0
      %v1128 = vadd.f32 %v678, %v1127
      %v1129 = vpop.f32.mrf.mxu0
      %v1130 = vpop.f32.mrf.mxu0
      %v1131 = vadd.f32 %v681, %v1130
      %v1132 = vpop.f32.mrf.mxu0
      %1133 = vdwg.mxu0
      %v1134 = vmax.f32 %v1128, 0.0
      %v1135 = vmax.f32 %v1131, 0.0
      %v1136 = vpack.c.bf16 %v1135, %v1134
      %v1138 = vsel %vm780, %v1136, 0
      %1140 = vmatprep.subr.bf16.mxu0 0
      %1141 = vmatpush1.bf16.msra.mxu0 0
      %1142 = vmatprep.subr.bf16.mxu0 0
      %1143 = vmatpush1.bf16.msra.mxu0 0
      %1144 = vmatprep.subr.bf16.mxu0 0
      %1145 = vmatpush1.bf16.msra.mxu0 0
      %1146 = vmatprep.subr.bf16.mxu0 0
      %1147 = vmatpush1.bf16.msra.mxu0 0
      %1148 = vmatprep.subr.bf16.mxu0 0
      %1149 = vmatpush1.bf16.msra.mxu0 0
      %1150 = vmatprep.subr.bf16.mxu0 0
      %1151 = vmatpush1.bf16.msra.mxu0 0
      %1152 = vmatprep.subr.bf16.mxu0 0
      %1153 = vmatpush1.bf16.msra.mxu0 %v777
      %1154 = vmatprep.subr.bf16.mxu0 0
      %1155 = vmatpush1.bf16.msra.mxu0 %v776
      %1156 = vmatprep.subr.bf16.mxu0 0
      %1157 = vmatpush2.bf16.msra.mxu0 0
      %1158 = vmatprep.subr.bf16.mxu0 0
      %1159 = vmatpush2.bf16.msra.mxu0 0
      %1160 = vmatprep.subr.bf16.mxu0 0
      %1161 = vmatpush2.bf16.msra.mxu0 0
      %1162 = vmatprep.subr.bf16.mxu0 0
      %1163 = vmatpush2.bf16.msra.mxu0 0
      %1164 = vmatprep.subr.bf16.mxu0 0
      %1165 = vmatpush2.bf16.msra.mxu0 0
      %1166 = vmatprep.subr.bf16.mxu0 0
      %1167 = vmatpush2.bf16.msra.mxu0 0
      %1168 = vmatprep.subr.bf16.mxu0 0
      %1169 = vmatpush2.bf16.msra.mxu0 0
      %1170 = vmatprep.subr.bf16.mxu0 0
      %1171 = vmatpush2.bf16.msra.mxu0 0
      %1172 = vmatprep.mubr.bf16.mxu0 0
      %1173 = vmatmul.mubr.bf16.gmra.mxu0 %v1138
      %v1174 = vpop.f32.mrf.mxu0
      %v1175 = vadd.f32 %v693, %v1174
      %v1176 = vpop.f32.mrf.mxu0
      %v1177 = vpop.f32.mrf.mxu0
      %v1178 = vadd.f32 %v693, %v1177
      %v1179 = vpop.f32.mrf.mxu0
      %1180 = vdwg.mxu0
      %v1181 = vmax.f32 %v1175, 0.0
      %v1182 = vmax.f32 %v1178, 0.0
      %v1183 = vmax.f32 %v1065, %v1181
      %v1184 = vmax.f32 %v1066, %v1182
      %1185 = vst.msk [vmem:[%s443] sm:$0xff] %vm780, %v1183
      %1186 = vst.msk [vmem:[%s443 + $0x8] sm:$0xff] %vm780, %v1184
      %s1187 = smul.u32 2, %s25
      %p1188 = scmp.lt.s32.totalorder %s24, 1
      %s1189 = scalar_select %p1188, %s24, 1
      %p1190 = scmp.lt.s32.totalorder %s1187, 1
      %s1191 = scalar_select %p1190, %s1187, 1
      %s1192 = smul.addr %s1189, 2
      %s1193 = sadd.s32 %s1191, %s1192
      %s1194 = smul.addr %s1193, 8
      %s1195 = scalar_lea.vmem %s9, %s1194
      // Predicated region
      $region57: #{model_forward.2} parent=55 // pred_check
        %p1196 = pneg %p265
      $region58: #{model_forward.2} parent=55 // pred_check_branch
        %1198 = sbr.rel (%p1196) target = $region60
      $region59: #{model_forward.2} parent=55 // pred_region
        %s1199 = smul.u32 2, %s25
      $region60: #{model_forward.2} parent=55 // pred_fallthru
        _
    $region56: #{model_forward.2} parent=5 // pred_fallthru
      _
    %p1200 = scmp.le.s32.totalorder 2, %s15
    // Predicated region
    $region61: #{model_forward.2} parent=5 // pred_check
      %p1201 = pneg %p1200
    $region62: #{model_forward.2} parent=5 // pred_check_branch
      %1203 = sbr.rel (%p1201) target = $region64
    $region63: #{model_forward.2} parent=5 // pred_region
      %s1204 = ssub.s32 %s15, 2
      // Predicated region
      $region65: #{model_forward.2} parent=63 // pred_check
        %p1205 = pneg %p271
      $region66: #{model_forward.2} parent=63 // pred_check_branch
        %1207 = sbr.rel (%p1205) target = $region68
      $region67: #{model_forward.2} parent=63 // pred_region
        %s1208 = smul.u32 2, %s27
        %p1209 = scmp.lt.s32.totalorder %s26, 1
        %s1210 = scalar_select %p1209, %s26, 1
        %p1211 = scmp.lt.s32.totalorder %s1208, 1
        %s1212 = scalar_select %p1211, %s1208, 1
        %s1213 = smul.addr %s1210, 2
        %s1214 = sadd.s32 %s1212, %s1213
        %s1215 = smul.addr %s1214, 8
        %s1216 = scalar_lea.vmem %s9, %s1215
      $region68: #{model_forward.2} parent=63 // pred_fallthru
        _
    $region64: #{model_forward.2} parent=5 // pred_fallthru
      _
  $region6: #{model_forward.2} parent=0 // loop_footer
    %s19 = sadd.s32 1, %s15
  $region7: #{model_forward.2} parent=0 // loop_footer_branch
    %14 = sbr.rel target = $region3
  $region8: #{model_forward.2} parent=0 // loop_exit
    _

</llo_original>
